<compile_context>
chip_gen: v7x
topology: tpu7x:2x2x1
jax: 0.10.0
libtpu: 0.0.40
codegen_flags: <defaults>
</compile_context>

<pallas_src>
import functools

import jax
import jax.numpy as jnp
from jax.experimental import pallas as pl
from jax.experimental.pallas import tpu as pltpu

OUT_PAD = 128  # lane-dense output width (sliced back to out_channels on host)


# ---------------------------------------------------------------------------
# Fused HierNet forward kernel: one block = `gb` graphs, rows flattened.
# ---------------------------------------------------------------------------
def _hiernet_kernel(x_ref, f_ref, cglob_ref, tgt_ref,
                    wa_bn_ref, ba_bn_ref, wa_ref, ba_ref,
                    wsrc_ref, gbias_ref, wo_mol_ref, wo_frag_ref, bo_ref,
                    o_ref, *, gb, n_atoms, n_frag, n_clu):
    f32, bf16 = jnp.float32, jnp.bfloat16
    rows_n = gb * n_atoms          # atom rows in this block
    rows_f = gb * n_frag           # fragment-node rows in this block
    rows_c = gb * n_clu            # cluster rows in this block

    # ---- atom path: mol_vec = relu(bn1(lin_a(x)))  (BN folded host-side) ----
    # global_add_pool(x, arange(N)) is identity; trailing .relu_() is a no-op.
    mol_vec = jnp.maximum(
        jnp.dot(x_ref[...], wa_bn_ref[...], preferred_element_type=f32)
        + ba_bn_ref[...], 0.0)                                     # [rows_n, H] f32

    # ---- MacFrag path: frag_h = relu(lin_a(frag_x))  (no BN on this branch) --
    frag_h = jnp.maximum(
        jnp.dot(f_ref[...], wa_ref[...], preferred_element_type=f32)
        + ba_ref[...], 0.0)                                        # [rows_f, H] f32

    # per-cluster segment-sum pool (+relu) via block-diagonal one-hot (bf16 MXU)
    onehot_cf = (jax.lax.broadcasted_iota(jnp.int32, (rows_c, rows_f), 0)
                 == cglob_ref[...]).astype(bf16)                   # [rows_c, rows_f]
    frag_pooled = jnp.maximum(
        jnp.dot(onehot_cf, frag_h.astype(bf16),
                preferred_element_type=f32), 0.0)                  # [rows_c, H]

    # ---- bipartite GATConv(heads=8, concat=False, add_self_loops=False) -----
    # Each target node receives exactly one edge -> softmax alpha == 1 exactly,
    # so the output is mean_heads(W_src @ frag_pooled) scattered to the target
    # rows + bias.  The per-head mean is folded into wsrc_ref host-side.
    proj = jnp.dot(frag_pooled.astype(bf16), wsrc_ref[...],
                   preferred_element_type=f32)                     # [rows_c, H]
    onehot_nc = (jax.lax.broadcasted_iota(jnp.int32, (rows_n, rows_c), 0)
                 == tgt_ref[...]).astype(bf16)                     # [rows_n, rows_c]
    frag_m_vec = jnp.maximum(
        jnp.dot(onehot_nc, proj.astype(bf16), preferred_element_type=f32)
        + gbias_ref[...], 0.0)                                     # [rows_n, H]

    # ---- out = Linear(cat([mol_vec, frag_m_vec], 1)); concat folded; padded --
    out = (jnp.dot(mol_vec.astype(bf16), wo_mol_ref[...],
                   preferred_element_type=f32)
           + jnp.dot(frag_m_vec.astype(bf16), wo_frag_ref[...],
                     preferred_element_type=f32)
           + bo_ref[...])                                          # [rows_n, 128]
    o_ref[...] = out                                               # lane-dense store


# ---------------------------------------------------------------------------
# One-time parameter preparation (BN fold, head-mean fold, bf16 cast, lane pad)
# ---------------------------------------------------------------------------
def prepare_params(params, *, heads=8, out_pad=OUT_PAD):
    f32, bf16 = jnp.float32, jnp.bfloat16
    hidden = params["lin_a_w"].shape[1]
    out_ch = params["out_w"].shape[1]
    assert out_ch <= out_pad

    scale = params["bn1_gamma"] / jnp.sqrt(params["bn1_var"] + 1e-5)
    shift = params["bn1_beta"] - params["bn1_mean"] * scale
    w_src_mean = params["gat_w_src"].reshape(hidden, heads, hidden).mean(axis=1)
    pad = ((0, 0), (0, out_pad - out_ch))

    return {
        "wa_bn": (params["lin_a_w"] * scale[None, :]).astype(bf16),
        "ba_bn": (params["lin_a_b"] * scale + shift).reshape(1, -1).astype(f32),
        "wa": params["lin_a_w"].astype(bf16),
        "ba": params["lin_a_b"].reshape(1, -1).astype(f32),
        "wsrc": w_src_mean.astype(bf16),
        "gbias": params["gat_bias"].reshape(1, -1).astype(f32),
        "wo_mol": jnp.pad(params["out_w"][:hidden], pad).astype(bf16),
        "wo_frag": jnp.pad(params["out_w"][hidden:], pad).astype(bf16),
        "bo": jnp.pad(params["out_b"].reshape(1, -1), pad).astype(f32),
    }


# ---------------------------------------------------------------------------
# HierNet forward (eval mode): one pallas_call over a parallel grid of
# graph-blocks; fully jit-able, no host sync.
# ---------------------------------------------------------------------------
@functools.partial(jax.jit, static_argnames=("num_clusters", "out_channels",
                                             "graphs_per_block"))
def hiernet_forward(kp, x, frag_x, cluster, *, num_clusters, out_channels,
                    graphs_per_block=8):
    f32, bf16 = jnp.float32, jnp.bfloat16
    g, n, in_ch = x.shape
    n_frag = frag_x.shape[1]
    c = num_clusters
    gb = graphs_per_block
    assert g % gb == 0, "pad the graph batch to a multiple of graphs_per_block"
    nb = g // gb
    hidden = kp["wa"].shape[1]

    # ---- per-block int32 index tables (cheap XLA ops, no host sync) ----
    pos = (jnp.arange(g) % gb).astype(jnp.int32)                    # slot in block
    cglob = (cluster.astype(jnp.int32) + c * pos[:, None]
             ).reshape(nb, 1, gb * n_frag)                          # cluster row ids
    onehot = cluster[:, :, None] == jnp.arange(c)[None, None, :]    # [G, F, C]
    tgt_local = jnp.max(
        jnp.where(onehot, jnp.arange(n_frag, dtype=jnp.int32)[None, :, None], -1),
        axis=1)                                                     # last frag idx / cluster
    tgt = jnp.where(tgt_local >= 0, tgt_local + n * pos[:, None], -1)
    tgt = tgt.astype(jnp.int32).reshape(nb, 1, gb * c)              # target atom rows

    x2 = x.reshape(g * n, in_ch).astype(bf16)
    f2 = frag_x.reshape(g * n_frag, in_ch).astype(bf16)

    kern = functools.partial(_hiernet_kernel, gb=gb, n_atoms=n,
                             n_frag=n_frag, n_clu=c)
    rep = lambda i: (0, 0)  # grid-invariant weight blocks (fetched once)

    out = pl.pallas_call(
        kern,
        out_shape=jax.ShapeDtypeStruct((g * n, OUT_PAD), f32),
        grid=(nb,),
        in_specs=[
            pl.BlockSpec((gb * n, in_ch), lambda i: (i, 0)),            # x
            pl.BlockSpec((gb * n_frag, in_ch), lambda i: (i, 0)),       # frag_x
            pl.BlockSpec((None, 1, gb * n_frag), lambda i: (i, 0, 0)),  # cluster ids
            pl.BlockSpec((None, 1, gb * c), lambda i: (i, 0, 0)),       # target rows
            pl.BlockSpec((in_ch, hidden), rep),                         # wa_bn
            pl.BlockSpec((1, hidden), rep),                             # ba_bn
            pl.BlockSpec((in_ch, hidden), rep),                         # wa
            pl.BlockSpec((1, hidden), rep),                             # ba
            pl.BlockSpec((hidden, hidden), rep),                        # wsrc (head-mean)
            pl.BlockSpec((1, hidden), rep),                             # gat bias
            pl.BlockSpec((hidden, OUT_PAD), rep),                       # out W (mol half)
            pl.BlockSpec((hidden, OUT_PAD), rep),                       # out W (frag half)
            pl.BlockSpec((1, OUT_PAD), rep),                            # out bias
        ],
        out_specs=pl.BlockSpec((gb * n, OUT_PAD), lambda i: (i, 0)),
        compiler_params=pltpu.CompilerParams(
            dimension_semantics=("parallel",),      # megacore-shard graph blocks
            vmem_limit_bytes=32 * 1024 * 1024),
    )(x2, f2, cglob, tgt,
      kp["wa_bn"], kp["ba_bn"], kp["wa"], kp["ba"],
      kp["wsrc"], kp["gbias"], kp["wo_mol"], kp["wo_frag"], kp["bo"])

    return out.reshape(g, n, OUT_PAD)[:, :, :out_channels]


# ---------------------------------------------------------------------------
# Pure-JAX f32 reference of the PyTorch eval forward (full GAT attention kept,
# dead conv loop skipped) — used only to validate the kernel in __main__.
# ---------------------------------------------------------------------------
def hiernet_reference(params, x, frag_x, cluster, *, num_clusters, heads=8,
                      negative_slope=0.01):
    f32 = jnp.float32
    hidden = params["lin_a_w"].shape[1]
    scale = params["bn1_gamma"] / jnp.sqrt(params["bn1_var"] + 1e-5)
    shift = params["bn1_beta"] - params["bn1_mean"] * scale

    def one_graph(xg, fg, cg):
        n, f = xg.shape[0], fg.shape[0]
        mol = jnp.maximum((xg @ params["lin_a_w"] + params["lin_a_b"]) * scale
                          + shift, 0.0)
        frag = jnp.maximum(fg @ params["lin_a_w"] + params["lin_a_b"], 0.0)
        onehot = (jnp.arange(num_clusters)[:, None] == cg[None, :]).astype(f32)
        pooled = jnp.maximum(onehot @ frag, 0.0)
        # consecutive_cluster perm -> last frag index per cluster (pool_batch = id)
        tgt = jnp.max(jnp.where(onehot > 0, jnp.arange(f)[None, :], -1), axis=1)
        # bipartite GATConv(heads, concat=False, add_self_loops=False)
        hs = (pooled @ params["gat_w_src"]).reshape(num_clusters, heads, hidden)
        hd = (mol @ params["gat_w_dst"]).reshape(n, heads, hidden)
        a_s = (hs * params["gat_att_src"].reshape(heads, hidden)).sum(-1)
        a_d = (hd * params["gat_att_dst"].reshape(heads, hidden)).sum(-1)
        e = a_s + a_d[tgt]
        e = jnp.where(e > 0, e, negative_slope * e)
        scat = (jnp.arange(n)[:, None] == tgt[None, :]).astype(f32)     # [N, C]
        m_t = jnp.max(jnp.where(scat[:, :, None] > 0, e[None, :, :], -jnp.inf),
                      axis=1)                                           # [N, heads]
        p = jnp.exp(e - m_t[tgt])
        denom = scat @ p
        alpha = p / denom[tgt]                                          # == 1 here
        agg = jnp.einsum('nc,chk->nhk', scat, hs * alpha[:, :, None])
        fragvec = jnp.maximum(agg.mean(axis=1) + params["gat_bias"], 0.0)
        return jnp.concatenate([mol, fragvec], 1) @ params["out_w"] + params["out_b"]

    return jax.vmap(one_graph)(x, frag_x, cluster)


# ---------------------------------------------------------------------------
# Deterministic parameter init (keeps the unused reference params for fidelity)
# ---------------------------------------------------------------------------
def init_params(key, in_channels, hidden, out_channels, edge_dim, heads=8):
    ks = jax.random.split(key, 20)
    nrm = lambda k, shp, s=0.1: s * jax.random.normal(k, shp, jnp.float32)
    return {
        "lin_a_w": nrm(ks[0], (in_channels, hidden)),
        "lin_a_b": nrm(ks[1], (hidden,)),
        "lin_b_w": nrm(ks[2], (edge_dim, hidden)),        # unused (dead branch)
        "lin_b_b": nrm(ks[3], (hidden,)),                 # unused (dead branch)
        "bn1_gamma": 1.0 + nrm(ks[4], (hidden,)),
        "bn1_beta": nrm(ks[5], (hidden,)),
        "bn1_mean": nrm(ks[6], (hidden,)),
        "bn1_var": 1.0 + 0.1 * jax.random.uniform(ks[7], (hidden,)),
        "bn2_gamma": 1.0 + nrm(ks[8], (hidden,)),         # unused (dead branch)
        "bn2_beta": nrm(ks[9], (hidden,)),                 # unused (dead branch)
        "bn2_mean": nrm(ks[10], (hidden,)),                # unused (dead branch)
        "bn2_var": 1.0 + 0.1 * jax.random.uniform(ks[11], (hidden,)),  # unused
        "gat_w_src": nrm(ks[12], (hidden, heads * hidden)),
        "gat_w_dst": nrm(ks[13], (hidden, heads * hidden)),   # only feeds alpha==1
        "gat_att_src": nrm(ks[14], (heads * hidden,)),        # only feeds alpha==1
        "gat_att_dst": nrm(ks[15], (heads * hidden,)),        # only feeds alpha==1
        "gat_bias": nrm(ks[16], (hidden,)),
        "out_w": nrm(ks[17], (2 * hidden, out_channels)),
        "out_b": nrm(ks[18], (out_channels,)),
    }


if __name__ == "__main__":
    IN_CH, HID, OUT_CH, EDGE_DIM, HEADS = 16, 32, 4, 10, 8
    N, F_NODES, C = 16, 12, 4
    G, GB = 16, 8           # 16 graphs, 8 per block -> grid=(2,), parallel

    key = jax.random.PRNGKey(0)
    k_data, k_par = jax.random.split(key)
    kd = jax.random.split(k_data, 4)

    x = jax.random.normal(kd[0], (G, N, IN_CH), jnp.float32)
    frag_x = jax.random.normal(kd[1], (G, F_NODES, IN_CH), jnp.float32)
    # consecutive cluster ids per graph (two different partitions, alternating)
    pat_a = jnp.array([0, 0, 0, 1, 1, 2, 2, 2, 3, 3, 3, 3], jnp.int32)
    pat_b = jnp.array([0, 1, 1, 1, 2, 2, 2, 3, 3, 3, 3, 3], jnp.int32)
    cluster = jnp.where((jnp.arange(G) % 2 == 0)[:, None],
                        pat_a[None, :], pat_b[None, :])
    # edge_index / edge_attr are consumed only by the dead conv loop -> unused.

    params = init_params(k_par, IN_CH, HID, OUT_CH, EDGE_DIM, heads=HEADS)
    kp = prepare_params(params, heads=HEADS)

    out = hiernet_forward(kp, x, frag_x, cluster, num_clusters=C,
                          out_channels=OUT_CH, graphs_per_block=GB)
    jax.block_until_ready(out)
    assert out.shape == (G, N, OUT_CH)

    ref = hiernet_reference(params, x, frag_x, cluster, num_clusters=C,
                            heads=HEADS)
    max_err = float(jnp.max(jnp.abs(out - ref)))
    assert jnp.allclose(out, ref, atol=1e-1, rtol=5e-2), max_err
    print("KERNEL_OK")
</pallas_src>

<mosaic_0001>
module attributes {stable_mosaic.version = 11 : i64} {
  func.func @_hiernet_kernel(%arg0: i32, %arg1: memref<128x16xbf16, #tpu.memory_space<vmem>>, %arg2: memref<96x16xbf16, #tpu.memory_space<vmem>>, %arg3: memref<1x1x96xi32, #tpu.memory_space<vmem>>, %arg4: memref<1x1x32xi32, #tpu.memory_space<vmem>>, %arg5: memref<16x32xbf16, #tpu.memory_space<vmem>>, %arg6: memref<1x32xf32, #tpu.memory_space<vmem>>, %arg7: memref<16x32xbf16, #tpu.memory_space<vmem>>, %arg8: memref<1x32xf32, #tpu.memory_space<vmem>>, %arg9: memref<32x32xbf16, #tpu.memory_space<vmem>>, %arg10: memref<1x32xf32, #tpu.memory_space<vmem>>, %arg11: memref<32x128xbf16, #tpu.memory_space<vmem>>, %arg12: memref<32x128xbf16, #tpu.memory_space<vmem>>, %arg13: memref<1x128xf32, #tpu.memory_space<vmem>>, %arg14: memref<128x128xf32, #tpu.memory_space<vmem>>) attributes {dimension_semantics = [#tpu.dimension_semantics<parallel>], iteration_bounds = array<i64: 2>, scalar_prefetch = 0 : i64, scratch_operands = 0 : i64, tpu.core_type = #tpu.core_type<tc>, window_params = [{transform_indices = @transform_0, window_bounds = array<i64: 128, 16>}, {transform_indices = @transform_1, window_bounds = array<i64: 96, 16>}, {transform_indices = @transform_2, window_bounds = array<i64: 1, 1, 96>}, {transform_indices = @transform_3, window_bounds = array<i64: 1, 1, 32>}, {pipeline_mode = #tpu.pipeline_mode<synchronous>, transform_indices = @transform_4, window_bounds = array<i64: 16, 32>}, {pipeline_mode = #tpu.pipeline_mode<synchronous>, transform_indices = @transform_5, window_bounds = array<i64: 1, 32>}, {pipeline_mode = #tpu.pipeline_mode<synchronous>, transform_indices = @transform_6, window_bounds = array<i64: 16, 32>}, {pipeline_mode = #tpu.pipeline_mode<synchronous>, transform_indices = @transform_7, window_bounds = array<i64: 1, 32>}, {pipeline_mode = #tpu.pipeline_mode<synchronous>, transform_indices = @transform_8, window_bounds = array<i64: 32, 32>}, {pipeline_mode = #tpu.pipeline_mode<synchronous>, transform_indices = @transform_9, window_bounds = array<i64: 1, 32>}, {pipeline_mode = #tpu.pipeline_mode<synchronous>, transform_indices = @transform_10, window_bounds = array<i64: 32, 128>}, {pipeline_mode = #tpu.pipeline_mode<synchronous>, transform_indices = @transform_11, window_bounds = array<i64: 32, 128>}, {pipeline_mode = #tpu.pipeline_mode<synchronous>, transform_indices = @transform_12, window_bounds = array<i64: 1, 128>}, {transform_indices = @transform_13, window_bounds = array<i64: 128, 128>}]} {
    %c0 = arith.constant 0 : index
    %c0_0 = arith.constant 0 : index
    %0 = vector.load %arg1[%c0, %c0_0] : memref<128x16xbf16, #tpu.memory_space<vmem>>, vector<128x16xbf16>
    %c0_1 = arith.constant 0 : index
    %c0_2 = arith.constant 0 : index
    %1 = vector.load %arg5[%c0_1, %c0_2] : memref<16x32xbf16, #tpu.memory_space<vmem>>, vector<16x32xbf16>
    %cst = arith.constant dense<0.000000e+00> : vector<128x32xf32>
    %2 = tpu.matmul %0, %1, %cst {dimension_numbers = #tpu.dot_dimension_numbers<[1], [0], [0], [1], [0, 0, 1, 1], [], []>} : vector<128x16xbf16>, vector<16x32xbf16>, vector<128x32xf32> -> vector<128x32xf32>
    %c0_3 = arith.constant 0 : index
    %c0_4 = arith.constant 0 : index
    %3 = vector.load %arg6[%c0_3, %c0_4] : memref<1x32xf32, #tpu.memory_space<vmem>>, vector<1x32xf32>
    %4 = vector.broadcast %3 : vector<1x32xf32> to vector<128x32xf32>
    %5 = arith.addf %2, %4 : vector<128x32xf32>
    %cst_5 = arith.constant 0.000000e+00 : f32
    %6 = vector.broadcast %cst_5 : f32 to vector<128x32xf32>
    %7 = arith.maximumf %5, %6 : vector<128x32xf32>
    %c0_6 = arith.constant 0 : index
    %c0_7 = arith.constant 0 : index
    %8 = vector.load %arg2[%c0_6, %c0_7] : memref<96x16xbf16, #tpu.memory_space<vmem>>, vector<96x16xbf16>
    %c0_8 = arith.constant 0 : index
    %c0_9 = arith.constant 0 : index
    %9 = vector.load %arg7[%c0_8, %c0_9] : memref<16x32xbf16, #tpu.memory_space<vmem>>, vector<16x32xbf16>
    %cst_10 = arith.constant dense<0.000000e+00> : vector<96x32xf32>
    %10 = tpu.matmul %8, %9, %cst_10 {dimension_numbers = #tpu.dot_dimension_numbers<[1], [0], [0], [1], [0, 0, 1, 1], [], []>} : vector<96x16xbf16>, vector<16x32xbf16>, vector<96x32xf32> -> vector<96x32xf32>
    %c0_11 = arith.constant 0 : index
    %c0_12 = arith.constant 0 : index
    %11 = vector.load %arg8[%c0_11, %c0_12] : memref<1x32xf32, #tpu.memory_space<vmem>>, vector<1x32xf32>
    %12 = vector.broadcast %11 : vector<1x32xf32> to vector<96x32xf32>
    %13 = arith.addf %10, %12 : vector<96x32xf32>
    %cst_13 = arith.constant 0.000000e+00 : f32
    %14 = vector.broadcast %cst_13 : f32 to vector<96x32xf32>
    %15 = arith.maximumf %13, %14 : vector<96x32xf32>
    %16 = tpu.iota {dimensions = array<i32: 0>} : vector<32x96xi32>
    %c0_14 = arith.constant 0 : index
    %c0_15 = arith.constant 0 : index
    %c0_16 = arith.constant 0 : index
    %17 = vector.load %arg3[%c0_14, %c0_15, %c0_16] : memref<1x1x96xi32, #tpu.memory_space<vmem>>, vector<1x1x96xi32>
    %18 = vector.shape_cast %17 : vector<1x1x96xi32> to vector<1x96xi32>
    %19 = vector.broadcast %18 : vector<1x96xi32> to vector<32x96xi32>
    %20 = arith.cmpi eq, %16, %19 : vector<32x96xi32>
    %21 = arith.extui %20 : vector<32x96xi1> to vector<32x96xi32>
    %22 = arith.sitofp %21 : vector<32x96xi32> to vector<32x96xf32>
    %23 = arith.truncf %22 : vector<32x96xf32> to vector<32x96xbf16>
    %24 = arith.truncf %15 : vector<96x32xf32> to vector<96x32xbf16>
    %cst_17 = arith.constant dense<0.000000e+00> : vector<32x32xf32>
    %25 = tpu.matmul %23, %24, %cst_17 {dimension_numbers = #tpu.dot_dimension_numbers<[1], [0], [0], [1], [0, 0, 1, 1], [], []>} : vector<32x96xbf16>, vector<96x32xbf16>, vector<32x32xf32> -> vector<32x32xf32>
    %cst_18 = arith.constant 0.000000e+00 : f32
    %26 = vector.broadcast %cst_18 : f32 to vector<32x32xf32>
    %27 = arith.maximumf %25, %26 : vector<32x32xf32>
    %28 = arith.truncf %27 : vector<32x32xf32> to vector<32x32xbf16>
    %c0_19 = arith.constant 0 : index
    %c0_20 = arith.constant 0 : index
    %29 = vector.load %arg9[%c0_19, %c0_20] : memref<32x32xbf16, #tpu.memory_space<vmem>>, vector<32x32xbf16>
    %cst_21 = arith.constant dense<0.000000e+00> : vector<32x32xf32>
    %30 = tpu.matmul %28, %29, %cst_21 {dimension_numbers = #tpu.dot_dimension_numbers<[1], [0], [0], [1], [0, 0, 1, 1], [], []>} : vector<32x32xbf16>, vector<32x32xbf16>, vector<32x32xf32> -> vector<32x32xf32>
    %31 = tpu.iota {dimensions = array<i32: 0>} : vector<128x32xi32>
    %c0_22 = arith.constant 0 : index
    %c0_23 = arith.constant 0 : index
    %c0_24 = arith.constant 0 : index
    %32 = vector.load %arg4[%c0_22, %c0_23, %c0_24] : memref<1x1x32xi32, #tpu.memory_space<vmem>>, vector<1x1x32xi32>
    %33 = vector.shape_cast %32 : vector<1x1x32xi32> to vector<1x32xi32>
    %34 = vector.broadcast %33 : vector<1x32xi32> to vector<128x32xi32>
    %35 = arith.cmpi eq, %31, %34 : vector<128x32xi32>
    %36 = arith.extui %35 : vector<128x32xi1> to vector<128x32xi32>
    %37 = arith.sitofp %36 : vector<128x32xi32> to vector<128x32xf32>
    %38 = arith.truncf %37 : vector<128x32xf32> to vector<128x32xbf16>
    %39 = arith.truncf %30 : vector<32x32xf32> to vector<32x32xbf16>
    %cst_25 = arith.constant dense<0.000000e+00> : vector<128x32xf32>
    %40 = tpu.matmul %38, %39, %cst_25 {dimension_numbers = #tpu.dot_dimension_numbers<[1], [0], [0], [1], [0, 0, 1, 1], [], []>} : vector<128x32xbf16>, vector<32x32xbf16>, vector<128x32xf32> -> vector<128x32xf32>
    %c0_26 = arith.constant 0 : index
    %c0_27 = arith.constant 0 : index
    %41 = vector.load %arg10[%c0_26, %c0_27] : memref<1x32xf32, #tpu.memory_space<vmem>>, vector<1x32xf32>
    %42 = vector.broadcast %41 : vector<1x32xf32> to vector<128x32xf32>
    %43 = arith.addf %40, %42 : vector<128x32xf32>
    %cst_28 = arith.constant 0.000000e+00 : f32
    %44 = vector.broadcast %cst_28 : f32 to vector<128x32xf32>
    %45 = arith.maximumf %43, %44 : vector<128x32xf32>
    %46 = arith.truncf %7 : vector<128x32xf32> to vector<128x32xbf16>
    %c0_29 = arith.constant 0 : index
    %c0_30 = arith.constant 0 : index
    %47 = vector.load %arg11[%c0_29, %c0_30] : memref<32x128xbf16, #tpu.memory_space<vmem>>, vector<32x128xbf16>
    %cst_31 = arith.constant dense<0.000000e+00> : vector<128x128xf32>
    %48 = tpu.matmul %46, %47, %cst_31 {dimension_numbers = #tpu.dot_dimension_numbers<[1], [0], [0], [1], [0, 0, 1, 1], [], []>} : vector<128x32xbf16>, vector<32x128xbf16>, vector<128x128xf32> -> vector<128x128xf32>
    %49 = arith.truncf %45 : vector<128x32xf32> to vector<128x32xbf16>
    %c0_32 = arith.constant 0 : index
    %c0_33 = arith.constant 0 : index
    %50 = vector.load %arg12[%c0_32, %c0_33] : memref<32x128xbf16, #tpu.memory_space<vmem>>, vector<32x128xbf16>
    %cst_34 = arith.constant dense<0.000000e+00> : vector<128x128xf32>
    %51 = tpu.matmul %49, %50, %cst_34 {dimension_numbers = #tpu.dot_dimension_numbers<[1], [0], [0], [1], [0, 0, 1, 1], [], []>} : vector<128x32xbf16>, vector<32x128xbf16>, vector<128x128xf32> -> vector<128x128xf32>
    %52 = arith.addf %48, %51 : vector<128x128xf32>
    %c0_35 = arith.constant 0 : index
    %c0_36 = arith.constant 0 : index
    %53 = vector.load %arg13[%c0_35, %c0_36] : memref<1x128xf32, #tpu.memory_space<vmem>>, vector<1x128xf32>
    %54 = vector.broadcast %53 : vector<1x128xf32> to vector<128x128xf32>
    %55 = arith.addf %52, %54 : vector<128x128xf32>
    %c0_37 = arith.constant 0 : index
    %c0_38 = arith.constant 0 : index
    %56 = vector.load %arg14[%c0_37, %c0_38] : memref<128x128xf32, #tpu.memory_space<vmem>>, vector<128x128xf32>
    tpu.vector_store %arg14[%c0_37, %c0_38], %55 {strides = array<i32>} : memref<128x128xf32, #tpu.memory_space<vmem>>, vector<128x128xf32>,
    return
  }
  func.func @transform_0(%arg0: i32) -> (i32, i32) {
    %c0_i32 = arith.constant 0 : i32
    %c0_i32_0 = arith.constant 0 : i32
    return %arg0, %c0_i32 : i32, i32
  }
  func.func @transform_1(%arg0: i32) -> (i32, i32) {
    %c0_i32 = arith.constant 0 : i32
    %c0_i32_0 = arith.constant 0 : i32
    return %arg0, %c0_i32 : i32, i32
  }
  func.func @transform_2(%arg0: i32) -> (i32, i32, i32) {
    %c0_i32 = arith.constant 0 : i32
    %c0_i32_0 = arith.constant 0 : i32
    %c0_i32_1 = arith.constant 0 : i32
    return %arg0, %c0_i32, %c0_i32_0 : i32, i32, i32
  }
  func.func @transform_3(%arg0: i32) -> (i32, i32, i32) {
    %c0_i32 = arith.constant 0 : i32
    %c0_i32_0 = arith.constant 0 : i32
    %c0_i32_1 = arith.constant 0 : i32
    return %arg0, %c0_i32, %c0_i32_0 : i32, i32, i32
  }
  func.func @transform_4(%arg0: i32) -> (i32, i32) {
    %c0_i32 = arith.constant 0 : i32
    %c0_i32_0 = arith.constant 0 : i32
    %c0_i32_1 = arith.constant 0 : i32
    return %c0_i32, %c0_i32_0 : i32, i32
  }
  func.func @transform_5(%arg0: i32) -> (i32, i32) {
    %c0_i32 = arith.constant 0 : i32
    %c0_i32_0 = arith.constant 0 : i32
    %c0_i32_1 = arith.constant 0 : i32
    return %c0_i32, %c0_i32_0 : i32, i32
  }
  func.func @transform_6(%arg0: i32) -> (i32, i32) {
    %c0_i32 = arith.constant 0 : i32
    %c0_i32_0 = arith.constant 0 : i32
    %c0_i32_1 = arith.constant 0 : i32
    return %c0_i32, %c0_i32_0 : i32, i32
  }
  func.func @transform_7(%arg0: i32) -> (i32, i32) {
    %c0_i32 = arith.constant 0 : i32
    %c0_i32_0 = arith.constant 0 : i32
    %c0_i32_1 = arith.constant 0 : i32
    return %c0_i32, %c0_i32_0 : i32, i32
  }
  func.func @transform_8(%arg0: i32) -> (i32, i32) {
    %c0_i32 = arith.constant 0 : i32
    %c0_i32_0 = arith.constant 0 : i32
    %c0_i32_1 = arith.constant 0 : i32
    return %c0_i32, %c0_i32_0 : i32, i32
  }
  func.func @transform_9(%arg0: i32) -> (i32, i32) {
    %c0_i32 = arith.constant 0 : i32
    %c0_i32_0 = arith.constant 0 : i32
    %c0_i32_1 = arith.constant 0 : i32
    return %c0_i32, %c0_i32_0 : i32, i32
  }
  func.func @transform_10(%arg0: i32) -> (i32, i32) {
    %c0_i32 = arith.constant 0 : i32
    %c0_i32_0 = arith.constant 0 : i32
    %c0_i32_1 = arith.constant 0 : i32
    return %c0_i32, %c0_i32_0 : i32, i32
  }
  func.func @transform_11(%arg0: i32) -> (i32, i32) {
    %c0_i32 = arith.constant 0 : i32
    %c0_i32_0 = arith.constant 0 : i32
    %c0_i32_1 = arith.constant 0 : i32
    return %c0_i32, %c0_i32_0 : i32, i32
  }
  func.func @transform_12(%arg0: i32) -> (i32, i32) {
    %c0_i32 = arith.constant 0 : i32
    %c0_i32_0 = arith.constant 0 : i32
    %c0_i32_1 = arith.constant 0 : i32
    return %c0_i32, %c0_i32_0 : i32, i32
  }
  func.func @transform_13(%arg0: i32) -> (i32, i32) {
    %c0_i32 = arith.constant 0 : i32
    %c0_i32_0 = arith.constant 0 : i32
    return %arg0, %c0_i32 : i32, i32
  }
}

</mosaic_0001>

<llo_original>
// kernel: hiernet_forward.1
$region0: #{hiernet_forward.1}
  #allocation0 [shape = 'u32[]', space=smem, size = 0x4, offset = 0x4, fixed_abs, tag = 'smem constant byte address 0x4 - core index']
  #allocation1 [shape = 'u32[144,128]{1,0:T(1,128)}', space=vmem, size = 0x12000, scoped, tag = 'internal scratch']
  %s0 = inlined_call_operand.vmem [shape: bf16[256,16], index: 0, kind: input, shape index: {}]
  %s1 = inlined_call_operand.vmem [shape: bf16[192,16], index: 1, kind: input, shape index: {}]
  %s2 = inlined_call_operand.vmem [shape: s32[2,1,96], index: 2, kind: input, shape index: {}]
  %s3 = inlined_call_operand.vmem [shape: s32[2,1,32], index: 3, kind: input, shape index: {}]
  %s4 = inlined_call_operand.vmem [shape: bf16[16,32], index: 4, kind: input, shape index: {}]
  %s5 = inlined_call_operand.vmem [shape: f32[1,32], index: 5, kind: input, shape index: {}]
  %s6 = inlined_call_operand.vmem [shape: bf16[16,32], index: 6, kind: input, shape index: {}]
  %s7 = inlined_call_operand.vmem [shape: f32[1,32], index: 7, kind: input, shape index: {}]
  %s8 = inlined_call_operand.vmem [shape: bf16[32,32], index: 8, kind: input, shape index: {}]
  %s9 = inlined_call_operand.vmem [shape: f32[1,32], index: 9, kind: input, shape index: {}]
  %s10 = inlined_call_operand.vmem [shape: bf16[32,128], index: 10, kind: input, shape index: {}]
  %s11 = inlined_call_operand.vmem [shape: bf16[32,128], index: 11, kind: input, shape index: {}]
  %s12 = inlined_call_operand.vmem [shape: f32[1,128], index: 12, kind: input, shape index: {}]
  %s13 = inlined_call_operand.vmem [shape: f32[256,128], index: 13, kind: output, shape index: {}]
  %s14 = sld [smem:[#allocation0]]
  $region85: #{hiernet_forward.1} parent=0
    _
  %s16 = ssub.s32 1, %s14
  %s17 = scalar_select 0, %s16, %s14
  loop: start=0, step=1, limit=4
  $region2: #{hiernet_forward.1} parent=0 // loop_pre_header
    _
  $region3: #{hiernet_forward.1} parent=0 // loop_header
    %s19 = sphi 0, %s23
    %p20 = scmp.ge.s32.totalorder %s19, 4
    %s29 = sphi 0, %s31
    %s32 = sphi 0, %s29
    %s33 = sphi 0, %s32
    %s49 = sphi 0, %s33
    %s55 = sphi 0, %s57
    %s58 = sphi 0, %s55
    %s59 = sphi 0, %s58
    %s75 = sphi 0, %s59
    %s81 = sphi 0, %s83
    %s84 = sphi 0, %s81
    %s85 = sphi 0, %s84
    %s101 = sphi 0, %s85
    %s107 = sphi 0, %s109
    %s110 = sphi 0, %s107
    %s111 = sphi 0, %s110
    %s127 = sphi 0, %s111
    %s131 = sphi 0, %s131
    %s133 = sphi 0, %s131
    %s134 = sphi 0, %s133
    %s148 = sphi 0, %s134
    %s152 = sphi 0, %s152
    %s154 = sphi 0, %s152
    %s155 = sphi 0, %s154
    %s169 = sphi 0, %s155
    %s173 = sphi 0, %s173
    %s175 = sphi 0, %s173
    %s176 = sphi 0, %s175
    %s190 = sphi 0, %s176
    %s194 = sphi 0, %s194
    %s196 = sphi 0, %s194
    %s197 = sphi 0, %s196
    %s211 = sphi 0, %s197
    %s215 = sphi 0, %s215
    %s217 = sphi 0, %s215
    %s218 = sphi 0, %s217
    %s232 = sphi 0, %s218
    %s236 = sphi 0, %s236
    %s238 = sphi 0, %s236
    %s239 = sphi 0, %s238
    %s253 = sphi 0, %s239
    %s257 = sphi 0, %s257
    %s259 = sphi 0, %s257
    %s260 = sphi 0, %s259
    %s274 = sphi 0, %s260
    %s278 = sphi 0, %s278
    %s280 = sphi 0, %s278
    %s281 = sphi 0, %s280
    %s295 = sphi 0, %s281
    %s299 = sphi 0, %s299
    %s301 = sphi 0, %s299
    %s302 = sphi 0, %s301
    %s316 = sphi 0, %s302
    %s322 = sphi 0, %s324
    %s325 = sphi 0, %s322
    %s326 = sphi 0, %s325
    %s342 = sphi 0, %s326
  $region4: #{hiernet_forward.1} parent=0 // loop_header_branch
    %22 = sbr.rel (%p20) target = $region8
  $region5: #{hiernet_forward.1} parent=0 // loop_body
    %s24 = ssub.s32 %s19, 1
    %s25 = ssub.s32 %s19, 2
    %s26 = sadd.s32 %s19, 1
    %s27 = ssub.s32 %s19, %s26
    %p28 = scmp.eq.s32.totalorder %s27, 0
    %s30 = sadd.s32 %s29, 1
    %s31 = scalar_select %p28, %s29, %s30
    %p34 = pneg %p28
    %p35 = scmp.eq.s32.totalorder %s19, 1
    %p36 = por %p34, %p35
    %p37 = scmp.ne.s32.totalorder %s29, %s32
    %p38 = scmp.eq.s32.totalorder %s19, 0
    %p39 = por %p37, %p38
    %p40 = scmp.ne.s32.totalorder %s29, %s32
    %p41 = scmp.eq.s32.totalorder %s24, 1
    %p42 = por %p40, %p41
    %p43 = scmp.ne.s32.totalorder %s32, %s33
    %p44 = scmp.eq.s32.totalorder %s24, 0
    %p45 = por %p43, %p44
    %p46 = scmp.ne.s32.totalorder %s32, %s33
    %p47 = scmp.eq.s32.totalorder %s25, 1
    %p48 = por %p46, %p47
    %p50 = scmp.ne.s32.totalorder %s33, %s49
    %p51 = scmp.eq.s32.totalorder %s25, 0
    %p52 = por %p50, %p51
    %s53 = ssub.s32 %s19, %s26
    %p54 = scmp.eq.s32.totalorder %s53, 0
    %s56 = sadd.s32 %s55, 1
    %s57 = scalar_select %p54, %s55, %s56
    %p60 = pneg %p54
    %p61 = scmp.eq.s32.totalorder %s19, 1
    %p62 = por %p60, %p61
    %p63 = scmp.ne.s32.totalorder %s55, %s58
    %p64 = scmp.eq.s32.totalorder %s19, 0
    %p65 = por %p63, %p64
    %p66 = scmp.ne.s32.totalorder %s55, %s58
    %p67 = scmp.eq.s32.totalorder %s24, 1
    %p68 = por %p66, %p67
    %p69 = scmp.ne.s32.totalorder %s58, %s59
    %p70 = scmp.eq.s32.totalorder %s24, 0
    %p71 = por %p69, %p70
    %p72 = scmp.ne.s32.totalorder %s58, %s59
    %p73 = scmp.eq.s32.totalorder %s25, 1
    %p74 = por %p72, %p73
    %p76 = scmp.ne.s32.totalorder %s59, %s75
    %p77 = scmp.eq.s32.totalorder %s25, 0
    %p78 = por %p76, %p77
    %s79 = ssub.s32 %s19, %s26
    %p80 = scmp.eq.s32.totalorder %s79, 0
    %s82 = sadd.s32 %s81, 1
    %s83 = scalar_select %p80, %s81, %s82
    %p86 = pneg %p80
    %p87 = scmp.eq.s32.totalorder %s19, 1
    %p88 = por %p86, %p87
    %p89 = scmp.ne.s32.totalorder %s81, %s84
    %p90 = scmp.eq.s32.totalorder %s19, 0
    %p91 = por %p89, %p90
    %p92 = scmp.ne.s32.totalorder %s81, %s84
    %p93 = scmp.eq.s32.totalorder %s24, 1
    %p94 = por %p92, %p93
    %p95 = scmp.ne.s32.totalorder %s84, %s85
    %p96 = scmp.eq.s32.totalorder %s24, 0
    %p97 = por %p95, %p96
    %p98 = scmp.ne.s32.totalorder %s84, %s85
    %p99 = scmp.eq.s32.totalorder %s25, 1
    %p100 = por %p98, %p99
    %p102 = scmp.ne.s32.totalorder %s85, %s101
    %p103 = scmp.eq.s32.totalorder %s25, 0
    %p104 = por %p102, %p103
    %s105 = ssub.s32 %s19, %s26
    %p106 = scmp.eq.s32.totalorder %s105, 0
    %s108 = sadd.s32 %s107, 1
    %s109 = scalar_select %p106, %s107, %s108
    %p112 = pneg %p106
    %p113 = scmp.eq.s32.totalorder %s19, 1
    %p114 = por %p112, %p113
    %p115 = scmp.ne.s32.totalorder %s107, %s110
    %p116 = scmp.eq.s32.totalorder %s19, 0
    %p117 = por %p115, %p116
    %p118 = scmp.ne.s32.totalorder %s107, %s110
    %p119 = scmp.eq.s32.totalorder %s24, 1
    %p120 = por %p118, %p119
    %p121 = scmp.ne.s32.totalorder %s110, %s111
    %p122 = scmp.eq.s32.totalorder %s24, 0
    %p123 = por %p121, %p122
    %p124 = scmp.ne.s32.totalorder %s110, %s111
    %p125 = scmp.eq.s32.totalorder %s25, 1
    %p126 = por %p124, %p125
    %p128 = scmp.ne.s32.totalorder %s111, %s127
    %p129 = scmp.eq.s32.totalorder %s25, 0
    %p130 = por %p128, %p129
    %s132 = sadd.s32 %s131, 1
    %p135 = scmp.eq.s32.totalorder %s19, 1
    %p136 = scmp.ne.s32.totalorder %s131, %s133
    %p137 = scmp.eq.s32.totalorder %s19, 0
    %p138 = por %p136, %p137
    %p139 = scmp.ne.s32.totalorder %s131, %s133
    %p140 = scmp.eq.s32.totalorder %s24, 1
    %p141 = por %p139, %p140
    %p142 = scmp.ne.s32.totalorder %s133, %s134
    %p143 = scmp.eq.s32.totalorder %s24, 0
    %p144 = por %p142, %p143
    %p145 = scmp.ne.s32.totalorder %s133, %s134
    %p146 = scmp.eq.s32.totalorder %s25, 1
    %p147 = por %p145, %p146
    %p149 = scmp.ne.s32.totalorder %s134, %s148
    %p150 = scmp.eq.s32.totalorder %s25, 0
    %p151 = por %p149, %p150
    %s153 = sadd.s32 %s152, 1
    %p156 = scmp.eq.s32.totalorder %s19, 1
    %p157 = scmp.ne.s32.totalorder %s152, %s154
    %p158 = scmp.eq.s32.totalorder %s19, 0
    %p159 = por %p157, %p158
    %p160 = scmp.ne.s32.totalorder %s152, %s154
    %p161 = scmp.eq.s32.totalorder %s24, 1
    %p162 = por %p160, %p161
    %p163 = scmp.ne.s32.totalorder %s154, %s155
    %p164 = scmp.eq.s32.totalorder %s24, 0
    %p165 = por %p163, %p164
    %p166 = scmp.ne.s32.totalorder %s154, %s155
    %p167 = scmp.eq.s32.totalorder %s25, 1
    %p168 = por %p166, %p167
    %p170 = scmp.ne.s32.totalorder %s155, %s169
    %p171 = scmp.eq.s32.totalorder %s25, 0
    %p172 = por %p170, %p171
    %s174 = sadd.s32 %s173, 1
    %p177 = scmp.eq.s32.totalorder %s19, 1
    %p178 = scmp.ne.s32.totalorder %s173, %s175
    %p179 = scmp.eq.s32.totalorder %s19, 0
    %p180 = por %p178, %p179
    %p181 = scmp.ne.s32.totalorder %s173, %s175
    %p182 = scmp.eq.s32.totalorder %s24, 1
    %p183 = por %p181, %p182
    %p184 = scmp.ne.s32.totalorder %s175, %s176
    %p185 = scmp.eq.s32.totalorder %s24, 0
    %p186 = por %p184, %p185
    %p187 = scmp.ne.s32.totalorder %s175, %s176
    %p188 = scmp.eq.s32.totalorder %s25, 1
    %p189 = por %p187, %p188
    %p191 = scmp.ne.s32.totalorder %s176, %s190
    %p192 = scmp.eq.s32.totalorder %s25, 0
    %p193 = por %p191, %p192
    %s195 = sadd.s32 %s194, 1
    %p198 = scmp.eq.s32.totalorder %s19, 1
    %p199 = scmp.ne.s32.totalorder %s194, %s196
    %p200 = scmp.eq.s32.totalorder %s19, 0
    %p201 = por %p199, %p200
    %p202 = scmp.ne.s32.totalorder %s194, %s196
    %p203 = scmp.eq.s32.totalorder %s24, 1
    %p204 = por %p202, %p203
    %p205 = scmp.ne.s32.totalorder %s196, %s197
    %p206 = scmp.eq.s32.totalorder %s24, 0
    %p207 = por %p205, %p206
    %p208 = scmp.ne.s32.totalorder %s196, %s197
    %p209 = scmp.eq.s32.totalorder %s25, 1
    %p210 = por %p208, %p209
    %p212 = scmp.ne.s32.totalorder %s197, %s211
    %p213 = scmp.eq.s32.totalorder %s25, 0
    %p214 = por %p212, %p213
    %s216 = sadd.s32 %s215, 1
    %p219 = scmp.eq.s32.totalorder %s19, 1
    %p220 = scmp.ne.s32.totalorder %s215, %s217
    %p221 = scmp.eq.s32.totalorder %s19, 0
    %p222 = por %p220, %p221
    %p223 = scmp.ne.s32.totalorder %s215, %s217
    %p224 = scmp.eq.s32.totalorder %s24, 1
    %p225 = por %p223, %p224
    %p226 = scmp.ne.s32.totalorder %s217, %s218
    %p227 = scmp.eq.s32.totalorder %s24, 0
    %p228 = por %p226, %p227
    %p229 = scmp.ne.s32.totalorder %s217, %s218
    %p230 = scmp.eq.s32.totalorder %s25, 1
    %p231 = por %p229, %p230
    %p233 = scmp.ne.s32.totalorder %s218, %s232
    %p234 = scmp.eq.s32.totalorder %s25, 0
    %p235 = por %p233, %p234
    %s237 = sadd.s32 %s236, 1
    %p240 = scmp.eq.s32.totalorder %s19, 1
    %p241 = scmp.ne.s32.totalorder %s236, %s238
    %p242 = scmp.eq.s32.totalorder %s19, 0
    %p243 = por %p241, %p242
    %p244 = scmp.ne.s32.totalorder %s236, %s238
    %p245 = scmp.eq.s32.totalorder %s24, 1
    %p246 = por %p244, %p245
    %p247 = scmp.ne.s32.totalorder %s238, %s239
    %p248 = scmp.eq.s32.totalorder %s24, 0
    %p249 = por %p247, %p248
    %p250 = scmp.ne.s32.totalorder %s238, %s239
    %p251 = scmp.eq.s32.totalorder %s25, 1
    %p252 = por %p250, %p251
    %p254 = scmp.ne.s32.totalorder %s239, %s253
    %p255 = scmp.eq.s32.totalorder %s25, 0
    %p256 = por %p254, %p255
    %s258 = sadd.s32 %s257, 1
    %p261 = scmp.eq.s32.totalorder %s19, 1
    %p262 = scmp.ne.s32.totalorder %s257, %s259
    %p263 = scmp.eq.s32.totalorder %s19, 0
    %p264 = por %p262, %p263
    %p265 = scmp.ne.s32.totalorder %s257, %s259
    %p266 = scmp.eq.s32.totalorder %s24, 1
    %p267 = por %p265, %p266
    %p268 = scmp.ne.s32.totalorder %s259, %s260
    %p269 = scmp.eq.s32.totalorder %s24, 0
    %p270 = por %p268, %p269
    %p271 = scmp.ne.s32.totalorder %s259, %s260
    %p272 = scmp.eq.s32.totalorder %s25, 1
    %p273 = por %p271, %p272
    %p275 = scmp.ne.s32.totalorder %s260, %s274
    %p276 = scmp.eq.s32.totalorder %s25, 0
    %p277 = por %p275, %p276
    %s279 = sadd.s32 %s278, 1
    %p282 = scmp.eq.s32.totalorder %s19, 1
    %p283 = scmp.ne.s32.totalorder %s278, %s280
    %p284 = scmp.eq.s32.totalorder %s19, 0
    %p285 = por %p283, %p284
    %p286 = scmp.ne.s32.totalorder %s278, %s280
    %p287 = scmp.eq.s32.totalorder %s24, 1
    %p288 = por %p286, %p287
    %p289 = scmp.ne.s32.totalorder %s280, %s281
    %p290 = scmp.eq.s32.totalorder %s24, 0
    %p291 = por %p289, %p290
    %p292 = scmp.ne.s32.totalorder %s280, %s281
    %p293 = scmp.eq.s32.totalorder %s25, 1
    %p294 = por %p292, %p293
    %p296 = scmp.ne.s32.totalorder %s281, %s295
    %p297 = scmp.eq.s32.totalorder %s25, 0
    %p298 = por %p296, %p297
    %s300 = sadd.s32 %s299, 1
    %p303 = scmp.eq.s32.totalorder %s19, 1
    %p304 = scmp.ne.s32.totalorder %s299, %s301
    %p305 = scmp.eq.s32.totalorder %s19, 0
    %p306 = por %p304, %p305
    %p307 = scmp.ne.s32.totalorder %s299, %s301
    %p308 = scmp.eq.s32.totalorder %s24, 1
    %p309 = por %p307, %p308
    %p310 = scmp.ne.s32.totalorder %s301, %s302
    %p311 = scmp.eq.s32.totalorder %s24, 0
    %p312 = por %p310, %p311
    %p313 = scmp.ne.s32.totalorder %s301, %s302
    %p314 = scmp.eq.s32.totalorder %s25, 1
    %p315 = por %p313, %p314
    %p317 = scmp.ne.s32.totalorder %s302, %s316
    %p318 = scmp.eq.s32.totalorder %s25, 0
    %p319 = por %p317, %p318
    %s320 = ssub.s32 %s19, %s26
    %p321 = scmp.eq.s32.totalorder %s320, 0
    %s323 = sadd.s32 %s322, 1
    %s324 = scalar_select %p321, %s322, %s323
    %p327 = pneg %p321
    %p328 = scmp.eq.s32.totalorder %s19, 1
    %p329 = por %p327, %p328
    %p330 = scmp.ne.s32.totalorder %s322, %s325
    %p331 = scmp.eq.s32.totalorder %s19, 0
    %p332 = por %p330, %p331
    %p333 = scmp.ne.s32.totalorder %s322, %s325
    %p334 = scmp.eq.s32.totalorder %s24, 1
    %p335 = por %p333, %p334
    %p336 = scmp.ne.s32.totalorder %s325, %s326
    %p337 = scmp.eq.s32.totalorder %s24, 0
    %p338 = por %p336, %p337
    %p339 = scmp.ne.s32.totalorder %s325, %s326
    %p340 = scmp.eq.s32.totalorder %s25, 1
    %p341 = por %p339, %p340
    %p343 = scmp.ne.s32.totalorder %s326, %s342
    %p344 = scmp.eq.s32.totalorder %s25, 0
    %p345 = por %p343, %p344
    %p346 = scmp.le.s32.totalorder 1, %s19
    %p347 = scmp.lt.s32.totalorder %s19, 3
    %p348 = pnand %p346, %p347
    %p349 = pneg %p348
    // Predicated region
    $region9: #{hiernet_forward.1} parent=5 // pred_check
      _
    $region10: #{hiernet_forward.1} parent=5 // pred_check_branch
      %351 = sbr.rel (%p348) target = $region12
    $region11: #{hiernet_forward.1} parent=5 // pred_region
      %s352 = ssub.s32 %s19, 1
      // Predicated region
      $region13: #{hiernet_forward.1} parent=11 // pred_check
        %p353 = pneg %p144
      $region14: #{hiernet_forward.1} parent=11 // pred_check_branch
        %355 = sbr.rel (%p353) target = $region16
      $region15: #{hiernet_forward.1} parent=11 // pred_region
        _
      $region16: #{hiernet_forward.1} parent=11 // pred_fallthru
        _
      // Predicated region
      $region17: #{hiernet_forward.1} parent=11 // pred_check
        %p356 = pneg %p165
      $region18: #{hiernet_forward.1} parent=11 // pred_check_branch
        %358 = sbr.rel (%p356) target = $region20
      $region19: #{hiernet_forward.1} parent=11 // pred_region
        _
      $region20: #{hiernet_forward.1} parent=11 // pred_fallthru
        _
      // Predicated region
      $region21: #{hiernet_forward.1} parent=11 // pred_check
        %p359 = pneg %p186
      $region22: #{hiernet_forward.1} parent=11 // pred_check_branch
        %361 = sbr.rel (%p359) target = $region24
      $region23: #{hiernet_forward.1} parent=11 // pred_region
        _
      $region24: #{hiernet_forward.1} parent=11 // pred_fallthru
        _
      // Predicated region
      $region25: #{hiernet_forward.1} parent=11 // pred_check
        %p362 = pneg %p207
      $region26: #{hiernet_forward.1} parent=11 // pred_check_branch
        %364 = sbr.rel (%p362) target = $region28
      $region27: #{hiernet_forward.1} parent=11 // pred_region
        _
      $region28: #{hiernet_forward.1} parent=11 // pred_fallthru
        _
      // Predicated region
      $region29: #{hiernet_forward.1} parent=11 // pred_check
        %p365 = pneg %p228
      $region30: #{hiernet_forward.1} parent=11 // pred_check_branch
        %367 = sbr.rel (%p365) target = $region32
      $region31: #{hiernet_forward.1} parent=11 // pred_region
        _
      $region32: #{hiernet_forward.1} parent=11 // pred_fallthru
        _
      // Predicated region
      $region33: #{hiernet_forward.1} parent=11 // pred_check
        %p368 = pneg %p249
      $region34: #{hiernet_forward.1} parent=11 // pred_check_branch
        %370 = sbr.rel (%p368) target = $region36
      $region35: #{hiernet_forward.1} parent=11 // pred_region
        _
      $region36: #{hiernet_forward.1} parent=11 // pred_fallthru
        _
      // Predicated region
      $region37: #{hiernet_forward.1} parent=11 // pred_check
        %p371 = pneg %p270
      $region38: #{hiernet_forward.1} parent=11 // pred_check_branch
        %373 = sbr.rel (%p371) target = $region40
      $region39: #{hiernet_forward.1} parent=11 // pred_region
        _
      $region40: #{hiernet_forward.1} parent=11 // pred_fallthru
        _
      // Predicated region
      $region41: #{hiernet_forward.1} parent=11 // pred_check
        %p374 = pneg %p291
      $region42: #{hiernet_forward.1} parent=11 // pred_check_branch
        %376 = sbr.rel (%p374) target = $region44
      $region43: #{hiernet_forward.1} parent=11 // pred_region
        _
      $region44: #{hiernet_forward.1} parent=11 // pred_fallthru
        _
      // Predicated region
      $region45: #{hiernet_forward.1} parent=11 // pred_check
        %p377 = pneg %p312
      $region46: #{hiernet_forward.1} parent=11 // pred_check_branch
        %379 = sbr.rel (%p377) target = $region48
      $region47: #{hiernet_forward.1} parent=11 // pred_region
        _
      $region48: #{hiernet_forward.1} parent=11 // pred_fallthru
        _
    $region12: #{hiernet_forward.1} parent=5 // pred_fallthru
      _
    %p380 = scmp.lt.s32.totalorder %s19, 2
    // Predicated region
    $region49: #{hiernet_forward.1} parent=5 // pred_check
      %p381 = pneg %p380
    $region50: #{hiernet_forward.1} parent=5 // pred_check_branch
      %383 = sbr.rel (%p381) target = $region52
    $region51: #{hiernet_forward.1} parent=5 // pred_region
      // Predicated region
      $region53: #{hiernet_forward.1} parent=51 // pred_check
        %p384 = pneg %p39
      $region54: #{hiernet_forward.1} parent=51 // pred_check_branch
        %386 = sbr.rel (%p384) target = $region56
      $region55: #{hiernet_forward.1} parent=51 // pred_region
        %s387 = smul.u32 16, %s19
        %p388 = scmp.lt.s32.totalorder %s387, 31
        %s389 = scalar_select %p388, %s387, 31
        %s390 = smul.addr %s389, 4
        %s391 = scalar_lea.vmem %s0, %s390
        %s392 = smul.u32 16, %s19
      $region56: #{hiernet_forward.1} parent=51 // pred_fallthru
        _
      // Predicated region
      $region57: #{hiernet_forward.1} parent=51 // pred_check
        %p393 = pneg %p65
      $region58: #{hiernet_forward.1} parent=51 // pred_check_branch
        %395 = sbr.rel (%p393) target = $region60
      $region59: #{hiernet_forward.1} parent=51 // pred_region
        %s396 = smul.u32 12, %s19
        %p397 = scmp.lt.s32.totalorder %s396, 23
        %s398 = scalar_select %p397, %s396, 23
        %s399 = smul.addr %s398, 4
        %s400 = scalar_lea.vmem %s1, %s399
        %s401 = smul.u32 12, %s19
      $region60: #{hiernet_forward.1} parent=51 // pred_fallthru
        _
      // Predicated region
      $region61: #{hiernet_forward.1} parent=51 // pred_check
        %p402 = pneg %p91
      $region62: #{hiernet_forward.1} parent=51 // pred_check_branch
        %404 = sbr.rel (%p402) target = $region64
      $region63: #{hiernet_forward.1} parent=51 // pred_region
        %p405 = scmp.lt.s32.totalorder %s19, 1
        %s406 = scalar_select %p405, %s19, 1
        %s407 = scalar_lea.vmem %s2, %s406
      $region64: #{hiernet_forward.1} parent=51 // pred_fallthru
        _
      // Predicated region
      $region65: #{hiernet_forward.1} parent=51 // pred_check
        %p408 = pneg %p117
      $region66: #{hiernet_forward.1} parent=51 // pred_check_branch
        %410 = sbr.rel (%p408) target = $region68
      $region67: #{hiernet_forward.1} parent=51 // pred_region
        %p411 = scmp.lt.s32.totalorder %s19, 1
        %s412 = scalar_select %p411, %s19, 1
        %s413 = scalar_lea.vmem %s3, %s412
      $region68: #{hiernet_forward.1} parent=51 // pred_fallthru
        _
    $region52: #{hiernet_forward.1} parent=5 // pred_fallthru
      _
    %p414 = scmp.le.s32.totalorder 1, %s19
    %p415 = scmp.lt.s32.totalorder %s19, 3
    %p416 = pnand %p414, %p415
    %p417 = pneg %p416
    // Predicated region
    $region69: #{hiernet_forward.1} parent=5 // pred_check
      _
    $region70: #{hiernet_forward.1} parent=5 // pred_check_branch
      %419 = sbr.rel (%p416) target = $region72
    $region71: #{hiernet_forward.1} parent=5 // pred_region
      %s420 = ssub.s32 %s19, 1
      %s421 = smul.u32 16, %s24
      %p422 = scmp.lt.s32.totalorder %s421, 31
      %s423 = scalar_select %p422, %s421, 31
      %s424 = smul.addr %s423, 4
      %s425 = scalar_lea.vmem %s0, %s424
      %p426 = pneg %p45
      %p427 = pneg %p42
      %s428 = smul.u32 12, %s24
      %p429 = scmp.lt.s32.totalorder %s428, 23
      %s430 = scalar_select %p429, %s428, 23
      %s431 = smul.addr %s430, 4
      %s432 = scalar_lea.vmem %s1, %s431
      %p433 = pneg %p71
      %p434 = pneg %p68
      %p435 = scmp.lt.s32.totalorder %s24, 1
      %s436 = scalar_select %p435, %s24, 1
      %s437 = scalar_lea.vmem %s2, %s436
      %p438 = pneg %p97
      %p439 = pneg %p94
      %p440 = scmp.lt.s32.totalorder %s24, 1
      %s441 = scalar_select %p440, %s24, 1
      %s442 = scalar_lea.vmem %s3, %s441
      %p443 = pneg %p123
      %p444 = pneg %p120
      %p445 = pneg %p144
      %p446 = pneg %p141
      %p447 = pneg %p165
      %p448 = pneg %p162
      %p449 = pneg %p186
      %p450 = pneg %p183
      %p451 = pneg %p207
      %p452 = pneg %p204
      %p453 = pneg %p228
      %p454 = pneg %p225
      %p455 = pneg %p249
      %p456 = pneg %p246
      %p457 = pneg %p270
      %p458 = pneg %p267
      %p459 = pneg %p291
      %p460 = pneg %p288
      %p461 = pneg %p312
      %p462 = pneg %p309
      %p463 = pneg %p338
      %p464 = pneg %p335
      %s465 = smul.u32 16, %s24
      %p466 = scmp.lt.s32.totalorder %s465, 31
      %s467 = scalar_select %p466, %s465, 31
      %s468 = smul.addr %s467, 8
      %s469 = scalar_lea.vmem %s13, %s468
      %s470 = smul.u32 16, %s24
      %p471 = scmp.lt.s32.totalorder %s470, 31
      %s472 = scalar_select %p471, %s470, 31
      %s473 = smul.addr %s472, 4
      %s474 = scalar_lea.vmem %s0, %s473
      %s475 = smul.u32 16, %s24
      %s476 = smul.u32 12, %s24
      %p477 = scmp.lt.s32.totalorder %s476, 23
      %s478 = scalar_select %p477, %s476, 23
      %s479 = smul.addr %s478, 4
      %s480 = scalar_lea.vmem %s1, %s479
      %s481 = smul.u32 12, %s24
      %p482 = scmp.lt.s32.totalorder %s24, 1
      %s483 = scalar_select %p482, %s24, 1
      %s484 = scalar_lea.vmem %s2, %s483
      %p485 = scmp.lt.s32.totalorder %s24, 1
      %s486 = scalar_select %p485, %s24, 1
      %s487 = scalar_lea.vmem %s3, %s486
      %s488 = smul.u32 16, %s24
      %p489 = scmp.lt.s32.totalorder %s488, 31
      %s490 = scalar_select %p489, %s488, 31
      %s491 = smul.addr %s490, 8
      %s492 = scalar_lea.vmem %s13, %s491
      %s493 = smul.u32 16, %s24
      %v495 = vld [vmem:[%s474] sm:$0xf]
      %v496 = vld [vmem:[%s474 + $0x4] sm:$0xf]
      %v497 = vld [vmem:[%s474 + $0x8] sm:$0xf]
      %v498 = vld [vmem:[%s474 + $0xc] sm:$0xf]
      %v499 = vld [vmem:[%s474 + $0x10] sm:$0xf]
      %v500 = vld [vmem:[%s474 + $0x14] sm:$0xf]
      %v501 = vld [vmem:[%s474 + $0x18] sm:$0xf]
      %v502 = vld [vmem:[%s474 + $0x1c] sm:$0xf]
      %v503 = vld [vmem:[%s474 + $0x20] sm:$0xf]
      %v504 = vld [vmem:[%s474 + $0x24] sm:$0xf]
      %v505 = vld [vmem:[%s474 + $0x28] sm:$0xf]
      %v506 = vld [vmem:[%s474 + $0x2c] sm:$0xf]
      %v507 = vld [vmem:[%s474 + $0x30] sm:$0xf]
      %v508 = vld [vmem:[%s474 + $0x34] sm:$0xf]
      %v509 = vld [vmem:[%s474 + $0x38] sm:$0xf]
      %v510 = vld [vmem:[%s474 + $0x3c] sm:$0xf]
      %v511 = vld [vmem:[%s4] sm:$0xf]
      %v512 = vld [vmem:[%s4 + $0x4] sm:$0xf]
      %v513 = vld [vmem:[%s5] sm:$0x1]
      %v515 = vlaneseq
      %v516 = vshrl.u32 %v515, 7
      %v517 = vsub.s32 0, %v516
      %v518 = vrot.slane %v513, %v517
      %v536 = vunpack.c.l.b16 %v495
      %v537 = vunpack.c.l.b16 %v496
      %v538 = vunpack.c.l.b16 %v497
      %v539 = vunpack.c.l.b16 %v498
      %v540 = vunpack.c.l.b16 %v499
      %v541 = vunpack.c.l.b16 %v500
      %v542 = vunpack.c.l.b16 %v501
      %v543 = vunpack.c.l.b16 %v502
      %v544 = vunpack.c.l.b16 %v503
      %v545 = vunpack.c.l.b16 %v504
      %v546 = vunpack.c.l.b16 %v505
      %v547 = vunpack.c.l.b16 %v506
      %v548 = vunpack.c.l.b16 %v507
      %v549 = vunpack.c.l.b16 %v508
      %v550 = vunpack.c.l.b16 %v509
      %v551 = vunpack.c.l.b16 %v510
      %v552 = vpack.c.b16 %v537, %v536
      %v553 = vpack.c.b16 %v539, %v538
      %v554 = vpack.c.b16 %v541, %v540
      %v555 = vpack.c.b16 %v543, %v542
      %v556 = vpack.c.b16 %v545, %v544
      %v557 = vpack.c.b16 %v547, %v546
      %v558 = vpack.c.b16 %v549, %v548
      %v559 = vpack.c.b16 %v551, %v550
      %v562 = vunpack.c.l.b16 %v511
      %v563 = vunpack.c.l.b16 %v512
      %v564 = vpack.c.b16 %v563, %v562
      %vm566 = vcmask 130048
      %v568 = vsel %vm566, %v552, 0
      %v571 = vsel %vm566, %v553, 0
      %v574 = vsel %vm566, %v554, 0
      %v577 = vsel %vm566, %v555, 0
      %v580 = vsel %vm566, %v556, 0
      %v583 = vsel %vm566, %v557, 0
      %v586 = vsel %vm566, %v558, 0
      %v589 = vsel %vm566, %v559, 0
      %591 = vmatprep.subr.bf16.mxu0 0
      %592 = vmatpush1.bf16.msra.mxu0 %v564
      %593 = vmatprep.subr.bf16.mxu0 0
      %594 = vmatpush1.bf16.msra.mxu0 0
      %595 = vmatprep.subr.bf16.mxu0 0
      %596 = vmatpush1.bf16.msra.mxu0 0
      %597 = vmatprep.subr.bf16.mxu0 0
      %598 = vmatpush1.bf16.msra.mxu0 0
      %599 = vmatprep.subr.bf16.mxu0 0
      %600 = vmatpush1.bf16.msra.mxu0 0
      %601 = vmatprep.subr.bf16.mxu0 0
      %602 = vmatpush1.bf16.msra.mxu0 0
      %603 = vmatprep.subr.bf16.mxu0 0
      %604 = vmatpush1.bf16.msra.mxu0 0
      %605 = vmatprep.subr.bf16.mxu0 0
      %606 = vmatpush1.bf16.msra.mxu0 0
      %607 = vmatprep.subr.bf16.mxu0 0
      %608 = vmatpush1.bf16.msra.mxu0 0
      %609 = vmatprep.subr.bf16.mxu0 0
      %610 = vmatpush1.bf16.msra.mxu0 0
      %611 = vmatprep.subr.bf16.mxu0 0
      %612 = vmatpush1.bf16.msra.mxu0 0
      %613 = vmatprep.subr.bf16.mxu0 0
      %614 = vmatpush1.bf16.msra.mxu0 0
      %615 = vmatprep.subr.bf16.mxu0 0
      %616 = vmatpush1.bf16.msra.mxu0 0
      %617 = vmatprep.subr.bf16.mxu0 0
      %618 = vmatpush1.bf16.msra.mxu0 0
      %619 = vmatprep.subr.bf16.mxu0 0
      %620 = vmatpush1.bf16.msra.mxu0 0
      %621 = vmatprep.subr.bf16.mxu0 0
      %622 = vmatpush1.bf16.msra.mxu0 0
      %623 = vmatprep.mubr.bf16.mxu0 0
      %624 = vmatmul.mubr.bf16.gmra.mrb[0].mxu0 %v568
      %v625 = vpop.f32.mrb[0].mxu0
      %v626 = vadd.f32 %v518, %v625
      %v627 = vpop.f32.mrb[0].mxu0
      %v628 = vpop.f32.mrb[0].mxu0
      %v629 = vadd.f32 %v518, %v628
      %v630 = vpop.f32.mrb[0].mxu0
      %631 = vmatprep.mubr.bf16.mxu0 0
      %632 = vmatmul.mubr.bf16.gmra.mrb[0].mxu0 %v571
      %v633 = vpop.f32.mrb[0].mxu0
      %v634 = vadd.f32 %v518, %v633
      %v635 = vpop.f32.mrb[0].mxu0
      %v636 = vpop.f32.mrb[0].mxu0
      %v637 = vadd.f32 %v518, %v636
      %v638 = vpop.f32.mrb[0].mxu0
      %639 = vmatprep.mubr.bf16.mxu0 0
      %640 = vmatmul.mubr.bf16.gmra.mrb[0].mxu0 %v574
      %v641 = vpop.f32.mrb[0].mxu0
      %v642 = vadd.f32 %v518, %v641
      %v643 = vpop.f32.mrb[0].mxu0
      %v644 = vpop.f32.mrb[0].mxu0
      %v645 = vadd.f32 %v518, %v644
      %v646 = vpop.f32.mrb[0].mxu0
      %647 = vmatprep.mubr.bf16.mxu0 0
      %648 = vmatmul.mubr.bf16.gmra.mrb[0].mxu0 %v577
      %v649 = vpop.f32.mrb[0].mxu0
      %v650 = vadd.f32 %v518, %v649
      %v651 = vpop.f32.mrb[0].mxu0
      %v652 = vpop.f32.mrb[0].mxu0
      %v653 = vadd.f32 %v518, %v652
      %v654 = vpop.f32.mrb[0].mxu0
      %655 = vmatprep.mubr.bf16.mxu0 0
      %656 = vmatmul.mubr.bf16.gmra.mrb[0].mxu0 %v580
      %v657 = vpop.f32.mrb[0].mxu0
      %v658 = vadd.f32 %v518, %v657
      %v659 = vpop.f32.mrb[0].mxu0
      %v660 = vpop.f32.mrb[0].mxu0
      %v661 = vadd.f32 %v518, %v660
      %v662 = vpop.f32.mrb[0].mxu0
      %663 = vmatprep.mubr.bf16.mxu0 0
      %664 = vmatmul.mubr.bf16.gmra.mrb[0].mxu0 %v583
      %v665 = vpop.f32.mrb[0].mxu0
      %v666 = vadd.f32 %v518, %v665
      %v667 = vpop.f32.mrb[0].mxu0
      %v668 = vpop.f32.mrb[0].mxu0
      %v669 = vadd.f32 %v518, %v668
      %v670 = vpop.f32.mrb[0].mxu0
      %671 = vmatprep.mubr.bf16.mxu0 0
      %672 = vmatmul.mubr.bf16.gmra.mrb[0].mxu0 %v586
      %v673 = vpop.f32.mrb[0].mxu0
      %v674 = vadd.f32 %v518, %v673
      %v675 = vpop.f32.mrb[0].mxu0
      %v676 = vpop.f32.mrb[0].mxu0
      %v677 = vadd.f32 %v518, %v676
      %v678 = vpop.f32.mrb[0].mxu0
      %679 = vmatprep.mubr.bf16.mxu0 0
      %680 = vmatmul.mubr.bf16.gmra.mrb[0].mxu0 %v589
      %v681 = vpop.f32.mrb[0].mxu0
      %v682 = vadd.f32 %v518, %v681
      %v683 = vpop.f32.mrb[0].mxu0
      %v684 = vpop.f32.mrb[0].mxu0
      %v685 = vadd.f32 %v518, %v684
      %v686 = vpop.f32.mrb[0].mxu0
      %687 = vdwg.mxu0
      %v688 = vmax.f32 %v626, 0.0
      %v689 = vmax.f32 %v629, 0.0
      %v690 = vmax.f32 %v634, 0.0
      %v691 = vmax.f32 %v637, 0.0
      %v692 = vmax.f32 %v642, 0.0
      %v693 = vmax.f32 %v645, 0.0
      %v694 = vmax.f32 %v650, 0.0
      %v695 = vmax.f32 %v653, 0.0
      %v696 = vmax.f32 %v658, 0.0
      %v697 = vmax.f32 %v661, 0.0
      %v698 = vmax.f32 %v666, 0.0
      %v699 = vmax.f32 %v669, 0.0
      %v700 = vmax.f32 %v674, 0.0
      %v701 = vmax.f32 %v677, 0.0
      %v702 = vmax.f32 %v682, 0.0
      %v703 = vmax.f32 %v685, 0.0
      %v704 = vld [vmem:[%s480] sm:$0xf]
      %v705 = vld [vmem:[%s480 + $0x4] sm:$0xf]
      %v706 = vld [vmem:[%s480 + $0x8] sm:$0xf]
      %v707 = vld [vmem:[%s480 + $0xc] sm:$0xf]
      %v708 = vld [vmem:[%s480 + $0x10] sm:$0xf]
      %v709 = vld [vmem:[%s480 + $0x14] sm:$0xf]
      %v710 = vld [vmem:[%s480 + $0x18] sm:$0xf]
      %v711 = vld [vmem:[%s480 + $0x1c] sm:$0xf]
      %v712 = vld [vmem:[%s480 + $0x20] sm:$0xf]
      %v713 = vld [vmem:[%s480 + $0x24] sm:$0xf]
      %v714 = vld [vmem:[%s480 + $0x28] sm:$0xf]
      %v715 = vld [vmem:[%s480 + $0x2c] sm:$0xf]
      %v716 = vld [vmem:[%s6] sm:$0xf]
      %v717 = vld [vmem:[%s6 + $0x4] sm:$0xf]
      %v718 = vld [vmem:[%s7] sm:$0x1]
      %v720 = vlaneseq
      %v721 = vshrl.u32 %v720, 7
      %v722 = vsub.s32 0, %v721
      %v723 = vrot.slane %v718, %v722
      %v737 = vunpack.c.l.b16 %v704
      %v738 = vunpack.c.l.b16 %v705
      %v739 = vunpack.c.l.b16 %v706
      %v740 = vunpack.c.l.b16 %v707
      %v741 = vunpack.c.l.b16 %v708
      %v742 = vunpack.c.l.b16 %v709
      %v743 = vunpack.c.l.b16 %v710
      %v744 = vunpack.c.l.b16 %v711
      %v745 = vunpack.c.l.b16 %v712
      %v746 = vunpack.c.l.b16 %v713
      %v747 = vunpack.c.l.b16 %v714
      %v748 = vunpack.c.l.b16 %v715
      %v749 = vpack.c.b16 %v738, %v737
      %v750 = vpack.c.b16 %v740, %v739
      %v751 = vpack.c.b16 %v742, %v741
      %v752 = vpack.c.b16 %v744, %v743
      %v753 = vpack.c.b16 %v746, %v745
      %v754 = vpack.c.b16 %v748, %v747
      %v757 = vunpack.c.l.b16 %v716
      %v758 = vunpack.c.l.b16 %v717
      %v759 = vpack.c.b16 %v758, %v757
      %v762 = vsel %vm566, %v749, 0
      %v765 = vsel %vm566, %v750, 0
      %v768 = vsel %vm566, %v751, 0
      %v771 = vsel %vm566, %v752, 0
      %v774 = vsel %vm566, %v753, 0
      %v777 = vsel %vm566, %v754, 0
      %779 = vmatprep.subr.bf16.mxu0 0
      %780 = vmatpush1.bf16.msra.mxu0 %v759
      %781 = vmatprep.subr.bf16.mxu0 0
      %782 = vmatpush1.bf16.msra.mxu0 0
      %783 = vmatprep.subr.bf16.mxu0 0
      %784 = vmatpush1.bf16.msra.mxu0 0
      %785 = vmatprep.subr.bf16.mxu0 0
      %786 = vmatpush1.bf16.msra.mxu0 0
      %787 = vmatprep.subr.bf16.mxu0 0
      %788 = vmatpush1.bf16.msra.mxu0 0
      %789 = vmatprep.subr.bf16.mxu0 0
      %790 = vmatpush1.bf16.msra.mxu0 0
      %791 = vmatprep.subr.bf16.mxu0 0
      %792 = vmatpush1.bf16.msra.mxu0 0
      %793 = vmatprep.subr.bf16.mxu0 0
      %794 = vmatpush1.bf16.msra.mxu0 0
      %795 = vmatprep.subr.bf16.mxu0 0
      %796 = vmatpush1.bf16.msra.mxu0 0
      %797 = vmatprep.subr.bf16.mxu0 0
      %798 = vmatpush1.bf16.msra.mxu0 0
      %799 = vmatprep.subr.bf16.mxu0 0
      %800 = vmatpush1.bf16.msra.mxu0 0
      %801 = vmatprep.subr.bf16.mxu0 0
      %802 = vmatpush1.bf16.msra.mxu0 0
      %803 = vmatprep.subr.bf16.mxu0 0
      %804 = vmatpush1.bf16.msra.mxu0 0
      %805 = vmatprep.subr.bf16.mxu0 0
      %806 = vmatpush1.bf16.msra.mxu0 0
      %807 = vmatprep.subr.bf16.mxu0 0
      %808 = vmatpush1.bf16.msra.mxu0 0
      %809 = vmatprep.subr.bf16.mxu0 0
      %810 = vmatpush1.bf16.msra.mxu0 0
      %811 = vmatprep.mubr.bf16.mxu0 0
      %812 = vmatmul.mubr.bf16.gmra.mrb[0].mxu0 %v762
      %v813 = vpop.f32.mrb[0].mxu0
      %v814 = vadd.f32 %v723, %v813
      %v815 = vpop.f32.mrb[0].mxu0
      %v816 = vpop.f32.mrb[0].mxu0
      %v817 = vadd.f32 %v723, %v816
      %v818 = vpop.f32.mrb[0].mxu0
      %819 = vmatprep.mubr.bf16.mxu0 0
      %820 = vmatmul.mubr.bf16.gmra.mrb[0].mxu0 %v765
      %v821 = vpop.f32.mrb[0].mxu0
      %v822 = vadd.f32 %v723, %v821
      %v823 = vpop.f32.mrb[0].mxu0
      %v824 = vpop.f32.mrb[0].mxu0
      %v825 = vadd.f32 %v723, %v824
      %v826 = vpop.f32.mrb[0].mxu0
      %827 = vmatprep.mubr.bf16.mxu0 0
      %828 = vmatmul.mubr.bf16.gmra.mrb[0].mxu0 %v768
      %v829 = vpop.f32.mrb[0].mxu0
      %v830 = vadd.f32 %v723, %v829
      %v831 = vpop.f32.mrb[0].mxu0
      %v832 = vpop.f32.mrb[0].mxu0
      %v833 = vadd.f32 %v723, %v832
      %v834 = vpop.f32.mrb[0].mxu0
      %835 = vmatprep.mubr.bf16.mxu0 0
      %836 = vmatmul.mubr.bf16.gmra.mrb[0].mxu0 %v771
      %v837 = vpop.f32.mrb[0].mxu0
      %v838 = vadd.f32 %v723, %v837
      %v839 = vpop.f32.mrb[0].mxu0
      %v840 = vpop.f32.mrb[0].mxu0
      %v841 = vadd.f32 %v723, %v840
      %v842 = vpop.f32.mrb[0].mxu0
      %843 = vmatprep.mubr.bf16.mxu0 0
      %844 = vmatmul.mubr.bf16.gmra.mrb[0].mxu0 %v774
      %v845 = vpop.f32.mrb[0].mxu0
      %v846 = vadd.f32 %v723, %v845
      %v847 = vpop.f32.mrb[0].mxu0
      %v848 = vpop.f32.mrb[0].mxu0
      %v849 = vadd.f32 %v723, %v848
      %v850 = vpop.f32.mrb[0].mxu0
      %851 = vmatprep.mubr.bf16.mxu0 0
      %852 = vmatmul.mubr.bf16.gmra.mrb[0].mxu0 %v777
      %v853 = vpop.f32.mrb[0].mxu0
      %v854 = vadd.f32 %v723, %v853
      %v855 = vpop.f32.mrb[0].mxu0
      %v856 = vpop.f32.mrb[0].mxu0
      %v857 = vadd.f32 %v723, %v856
      %v858 = vpop.f32.mrb[0].mxu0
      %859 = vdwg.mxu0
      %v860 = vmax.f32 %v814, 0.0
      %v861 = vmax.f32 %v817, 0.0
      %v862 = vmax.f32 %v822, 0.0
      %v863 = vmax.f32 %v825, 0.0
      %v864 = vmax.f32 %v830, 0.0
      %v865 = vmax.f32 %v833, 0.0
      %v866 = vmax.f32 %v838, 0.0
      %v867 = vmax.f32 %v841, 0.0
      %v868 = vmax.f32 %v846, 0.0
      %v869 = vmax.f32 %v849, 0.0
      %v870 = vmax.f32 %v854, 0.0
      %v871 = vmax.f32 %v857, 0.0
      %v872 = vlaneseq
      %v873 = vshrl.u32 %v872, 7
      %v874 = vadd.s32 %v873, 8
      %v875 = vadd.s32 %v873, 16
      %v876 = vadd.s32 %v873, 24
      %v877 = vld [vmem:[%s484] sm:$0x1]
      %v878 = vlaneseq
      %v879 = vshrl.u32 %v878, 7
      %v880 = vsub.s32 0, %v879
      %v881 = vrot.slane %v877, %v880
      %vm882 = vcmp.eq.s32.totalorder %v873, %v881
      %vm883 = vcmp.eq.s32.totalorder %v874, %v881
      %vm884 = vcmp.eq.s32.totalorder %v875, %v881
      %vm885 = vcmp.eq.s32.totalorder %v876, %v881
      %v886 = vsel %vm882, 1, 0
      %v887 = vsel %vm883, 1, 0
      %v888 = vsel %vm884, 1, 0
      %v889 = vsel %vm885, 1, 0
      %v890 = vcvt.s32.f32 %v886
      %v891 = vcvt.s32.f32 %v887
      %v892 = vcvt.s32.f32 %v888
      %v893 = vcvt.s32.f32 %v889
      %v894 = vpack.c.bf16 %v891, %v890
      %v895 = vpack.c.bf16 %v893, %v892
      %v896 = vpack.c.bf16 %v861, %v860
      %v897 = vpack.c.bf16 %v863, %v862
      %v898 = vpack.c.bf16 %v865, %v864
      %v899 = vpack.c.bf16 %v867, %v866
      %v900 = vpack.c.bf16 %v869, %v868
      %v901 = vpack.c.bf16 %v871, %v870
      %vm902 = vcmask 785408
      %v904 = vsel %vm902, %v894, 0
      %v907 = vsel %vm902, %v895, 0
      %909 = vmatprep.subr.bf16.mxu0 0
      %910 = vmatpush1.bf16.msra.mxu0 %v896
      %911 = vmatprep.subr.bf16.mxu0 0
      %912 = vmatpush1.bf16.msra.mxu0 %v897
      %913 = vmatprep.subr.bf16.mxu0 0
      %914 = vmatpush1.bf16.msra.mxu0 %v898
      %915 = vmatprep.subr.bf16.mxu0 0
      %916 = vmatpush1.bf16.msra.mxu0 %v899
      %917 = vmatprep.subr.bf16.mxu0 0
      %918 = vmatpush1.bf16.msra.mxu0 %v900
      %919 = vmatprep.subr.bf16.mxu0 0
      %920 = vmatpush1.bf16.msra.mxu0 %v901
      %921 = vmatprep.subr.bf16.mxu0 0
      %922 = vmatpush1.bf16.msra.mxu0 0
      %923 = vmatprep.subr.bf16.mxu0 0
      %924 = vmatpush1.bf16.msra.mxu0 0
      %925 = vmatprep.subr.bf16.mxu0 0
      %926 = vmatpush1.bf16.msra.mxu0 0
      %927 = vmatprep.subr.bf16.mxu0 0
      %928 = vmatpush1.bf16.msra.mxu0 0
      %929 = vmatprep.subr.bf16.mxu0 0
      %930 = vmatpush1.bf16.msra.mxu0 0
      %931 = vmatprep.subr.bf16.mxu0 0
      %932 = vmatpush1.bf16.msra.mxu0 0
      %933 = vmatprep.subr.bf16.mxu0 0
      %934 = vmatpush1.bf16.msra.mxu0 0
      %935 = vmatprep.subr.bf16.mxu0 0
      %936 = vmatpush1.bf16.msra.mxu0 0
      %937 = vmatprep.subr.bf16.mxu0 0
      %938 = vmatpush1.bf16.msra.mxu0 0
      %939 = vmatprep.subr.bf16.mxu0 0
      %940 = vmatpush1.bf16.msra.mxu0 0
      %941 = vmatprep.mubr.bf16.mxu0 0
      %942 = vmatmul.mubr.bf16.gmra.mrb[0].mxu0 %v904
      %v943 = vpop.f32.mrb[0].mxu0
      %v944 = vadd.f32 0.0, %v943
      %v945 = vpop.f32.mrb[0].mxu0
      %v946 = vpop.f32.mrb[0].mxu0
      %v947 = vadd.f32 0.0, %v946
      %v948 = vpop.f32.mrb[0].mxu0
      %949 = vmatprep.mubr.bf16.mxu0 0
      %950 = vmatmul.mubr.bf16.gmra.mrb[0].mxu0 %v907
      %v951 = vpop.f32.mrb[0].mxu0
      %v952 = vadd.f32 0.0, %v951
      %v953 = vpop.f32.mrb[0].mxu0
      %v954 = vpop.f32.mrb[0].mxu0
      %v955 = vadd.f32 0.0, %v954
      %v956 = vpop.f32.mrb[0].mxu0
      %957 = vdwg.mxu0
      %v958 = vmax.f32 %v944, 0.0
      %v959 = vmax.f32 %v947, 0.0
      %v960 = vmax.f32 %v952, 0.0
      %v961 = vmax.f32 %v955, 0.0
      %v962 = vpack.c.bf16 %v959, %v958
      %v963 = vpack.c.bf16 %v961, %v960
      %v964 = vld [vmem:[%s8] sm:$0xf]
      %v965 = vld [vmem:[%s8 + $0x4] sm:$0xf]
      %v966 = vld [vmem:[%s8 + $0x8] sm:$0xf]
      %v967 = vld [vmem:[%s8 + $0xc] sm:$0xf]
      %v972 = vunpack.c.l.b16 %v964
      %v973 = vunpack.c.l.b16 %v965
      %v974 = vunpack.c.l.b16 %v966
      %v975 = vunpack.c.l.b16 %v967
      %v976 = vpack.c.b16 %v973, %v972
      %v977 = vpack.c.b16 %v975, %v974
      %vm980 = vcmask 261120
      %v982 = vsel %vm980, %v962, 0
      %v985 = vsel %vm980, %v963, 0
      %987 = vmatprep.subr.bf16.mxu0 0
      %988 = vmatpush1.bf16.msra.mxu0 %v976
      %989 = vmatprep.subr.bf16.mxu0 0
      %990 = vmatpush1.bf16.msra.mxu0 %v977
      %991 = vmatprep.subr.bf16.mxu0 0
      %992 = vmatpush1.bf16.msra.mxu0 0
      %993 = vmatprep.subr.bf16.mxu0 0
      %994 = vmatpush1.bf16.msra.mxu0 0
      %995 = vmatprep.subr.bf16.mxu0 0
      %996 = vmatpush1.bf16.msra.mxu0 0
      %997 = vmatprep.subr.bf16.mxu0 0
      %998 = vmatpush1.bf16.msra.mxu0 0
      %999 = vmatprep.subr.bf16.mxu0 0
      %1000 = vmatpush1.bf16.msra.mxu0 0
      %1001 = vmatprep.subr.bf16.mxu0 0
      %1002 = vmatpush1.bf16.msra.mxu0 0
      %1003 = vmatprep.subr.bf16.mxu0 0
      %1004 = vmatpush1.bf16.msra.mxu0 0
      %1005 = vmatprep.subr.bf16.mxu0 0
      %1006 = vmatpush1.bf16.msra.mxu0 0
      %1007 = vmatprep.subr.bf16.mxu0 0
      %1008 = vmatpush1.bf16.msra.mxu0 0
      %1009 = vmatprep.subr.bf16.mxu0 0
      %1010 = vmatpush1.bf16.msra.mxu0 0
      %1011 = vmatprep.subr.bf16.mxu0 0
      %1012 = vmatpush1.bf16.msra.mxu0 0
      %1013 = vmatprep.subr.bf16.mxu0 0
      %1014 = vmatpush1.bf16.msra.mxu0 0
      %1015 = vmatprep.subr.bf16.mxu0 0
      %1016 = vmatpush1.bf16.msra.mxu0 0
      %1017 = vmatprep.subr.bf16.mxu0 0
      %1018 = vmatpush1.bf16.msra.mxu0 0
      %1019 = vmatprep.mubr.bf16.mxu0 0
      %1020 = vmatmul.mubr.bf16.gmra.mrb[0].mxu0 %v982
      %v1021 = vpop.f32.mrb[0].mxu0
      %v1022 = vadd.f32 0.0, %v1021
      %v1023 = vpop.f32.mrb[0].mxu0
      %v1024 = vpop.f32.mrb[0].mxu0
      %v1025 = vadd.f32 0.0, %v1024
      %v1026 = vpop.f32.mrb[0].mxu0
      %1027 = vmatprep.mubr.bf16.mxu0 0
      %1028 = vmatmul.mubr.bf16.gmra.mrb[0].mxu0 %v985
      %v1029 = vpop.f32.mrb[0].mxu0
      %v1030 = vadd.f32 0.0, %v1029
      %v1031 = vpop.f32.mrb[0].mxu0
      %v1032 = vpop.f32.mrb[0].mxu0
      %v1033 = vadd.f32 0.0, %v1032
      %v1034 = vpop.f32.mrb[0].mxu0
      %1035 = vdwg.mxu0
      %v1036 = vadd.s32 %v873, 32
      %v1037 = vadd.s32 %v873, 40
      %v1038 = vadd.s32 %v873, 48
      %v1039 = vadd.s32 %v873, 56
      %v1040 = vadd.s32 %v873, 64
      %v1041 = vadd.s32 %v873, 72
      %v1042 = vadd.s32 %v873, 80
      %v1043 = vadd.s32 %v873, 88
      %v1044 = vadd.s32 %v873, 96
      %v1045 = vadd.s32 %v873, 104
      %v1046 = vadd.s32 %v873, 112
      %v1047 = vadd.s32 %v873, 120
      %v1048 = vld [vmem:[%s487] sm:$0x1]
      %v1049 = vlaneseq
      %v1050 = vshrl.u32 %v1049, 7
      %v1051 = vsub.s32 0, %v1050
      %v1052 = vrot.slane %v1048, %v1051
      %vm1053 = vcmp.eq.s32.totalorder %v873, %v1052
      %vm1054 = vcmp.eq.s32.totalorder %v874, %v1052
      %vm1055 = vcmp.eq.s32.totalorder %v875, %v1052
      %vm1056 = vcmp.eq.s32.totalorder %v876, %v1052
      %vm1057 = vcmp.eq.s32.totalorder %v1036, %v1052
      %vm1058 = vcmp.eq.s32.totalorder %v1037, %v1052
      %vm1059 = vcmp.eq.s32.totalorder %v1038, %v1052
      %vm1060 = vcmp.eq.s32.totalorder %v1039, %v1052
      %vm1061 = vcmp.eq.s32.totalorder %v1040, %v1052
      %vm1062 = vcmp.eq.s32.totalorder %v1041, %v1052
      %vm1063 = vcmp.eq.s32.totalorder %v1042, %v1052
      %vm1064 = vcmp.eq.s32.totalorder %v1043, %v1052
      %vm1065 = vcmp.eq.s32.totalorder %v1044, %v1052
      %vm1066 = vcmp.eq.s32.totalorder %v1045, %v1052
      %vm1067 = vcmp.eq.s32.totalorder %v1046, %v1052
      %vm1068 = vcmp.eq.s32.totalorder %v1047, %v1052
      %v1069 = vsel %vm1053, 1, 0
      %v1070 = vsel %vm1054, 1, 0
      %v1071 = vsel %vm1055, 1, 0
      %v1072 = vsel %vm1056, 1, 0
      %v1073 = vsel %vm1057, 1, 0
      %v1074 = vsel %vm1058, 1, 0
      %v1075 = vsel %vm1059, 1, 0
      %v1076 = vsel %vm1060, 1, 0
      %v1077 = vsel %vm1061, 1, 0
      %v1078 = vsel %vm1062, 1, 0
      %v1079 = vsel %vm1063, 1, 0
      %v1080 = vsel %vm1064, 1, 0
      %v1081 = vsel %vm1065, 1, 0
      %v1082 = vsel %vm1066, 1, 0
      %v1083 = vsel %vm1067, 1, 0
      %v1084 = vsel %vm1068, 1, 0
      %v1085 = vcvt.s32.f32 %v1069
      %v1086 = vcvt.s32.f32 %v1070
      %v1087 = vcvt.s32.f32 %v1071
      %v1088 = vcvt.s32.f32 %v1072
      %v1089 = vcvt.s32.f32 %v1073
      %v1090 = vcvt.s32.f32 %v1074
      %v1091 = vcvt.s32.f32 %v1075
      %v1092 = vcvt.s32.f32 %v1076
      %v1093 = vcvt.s32.f32 %v1077
      %v1094 = vcvt.s32.f32 %v1078
      %v1095 = vcvt.s32.f32 %v1079
      %v1096 = vcvt.s32.f32 %v1080
      %v1097 = vcvt.s32.f32 %v1081
      %v1098 = vcvt.s32.f32 %v1082
      %v1099 = vcvt.s32.f32 %v1083
      %v1100 = vcvt.s32.f32 %v1084
      %v1101 = vpack.c.bf16 %v1086, %v1085
      %v1102 = vpack.c.bf16 %v1088, %v1087
      %v1103 = vpack.c.bf16 %v1090, %v1089
      %v1104 = vpack.c.bf16 %v1092, %v1091
      %v1105 = vpack.c.bf16 %v1094, %v1093
      %v1106 = vpack.c.bf16 %v1096, %v1095
      %v1107 = vpack.c.bf16 %v1098, %v1097
      %v1108 = vpack.c.bf16 %v1100, %v1099
      %v1109 = vpack.c.bf16 %v1025, %v1022
      %v1110 = vpack.c.bf16 %v1033, %v1030
      %v1111 = vld [vmem:[%s9] sm:$0x1]
      %v1113 = vlaneseq
      %v1114 = vshrl.u32 %v1113, 7
      %v1115 = vsub.s32 0, %v1114
      %v1116 = vrot.slane %v1111, %v1115
      %v1119 = vsel %vm980, %v1101, 0
      %v1122 = vsel %vm980, %v1102, 0
      %v1125 = vsel %vm980, %v1103, 0
      %v1128 = vsel %vm980, %v1104, 0
      %v1131 = vsel %vm980, %v1105, 0
      %v1134 = vsel %vm980, %v1106, 0
      %v1137 = vsel %vm980, %v1107, 0
      %v1140 = vsel %vm980, %v1108, 0
      %1142 = vmatprep.subr.bf16.mxu0 0
      %1143 = vmatpush1.bf16.msra.mxu0 %v1109
      %1144 = vmatprep.subr.bf16.mxu0 0
      %1145 = vmatpush1.bf16.msra.mxu0 %v1110
      %1146 = vmatprep.subr.bf16.mxu0 0
      %1147 = vmatpush1.bf16.msra.mxu0 0
      %1148 = vmatprep.subr.bf16.mxu0 0
      %1149 = vmatpush1.bf16.msra.mxu0 0
      %1150 = vmatprep.subr.bf16.mxu0 0
      %1151 = vmatpush1.bf16.msra.mxu0 0
      %1152 = vmatprep.subr.bf16.mxu0 0
      %1153 = vmatpush1.bf16.msra.mxu0 0
      %1154 = vmatprep.subr.bf16.mxu0 0
      %1155 = vmatpush1.bf16.msra.mxu0 0
      %1156 = vmatprep.subr.bf16.mxu0 0
      %1157 = vmatpush1.bf16.msra.mxu0 0
      %1158 = vmatprep.subr.bf16.mxu0 0
      %1159 = vmatpush1.bf16.msra.mxu0 0
      %1160 = vmatprep.subr.bf16.mxu0 0
      %1161 = vmatpush1.bf16.msra.mxu0 0
      %1162 = vmatprep.subr.bf16.mxu0 0
      %1163 = vmatpush1.bf16.msra.mxu0 0
      %1164 = vmatprep.subr.bf16.mxu0 0
      %1165 = vmatpush1.bf16.msra.mxu0 0
      %1166 = vmatprep.subr.bf16.mxu0 0
      %1167 = vmatpush1.bf16.msra.mxu0 0
      %1168 = vmatprep.subr.bf16.mxu0 0
      %1169 = vmatpush1.bf16.msra.mxu0 0
      %1170 = vmatprep.subr.bf16.mxu0 0
      %1171 = vmatpush1.bf16.msra.mxu0 0
      %1172 = vmatprep.subr.bf16.mxu0 0
      %1173 = vmatpush1.bf16.msra.mxu0 0
      %1174 = vmatprep.mubr.bf16.mxu0 0
      %1175 = vmatmul.mubr.bf16.gmra.mrb[0].mxu0 %v1119
      %v1176 = vpop.f32.mrb[0].mxu0
      %v1177 = vadd.f32 %v1116, %v1176
      %v1178 = vpop.f32.mrb[0].mxu0
      %v1179 = vpop.f32.mrb[0].mxu0
      %v1180 = vadd.f32 %v1116, %v1179
      %v1181 = vpop.f32.mrb[0].mxu0
      %1182 = vmatprep.mubr.bf16.mxu0 0
      %1183 = vmatmul.mubr.bf16.gmra.mrb[0].mxu0 %v1122
      %v1184 = vpop.f32.mrb[0].mxu0
      %v1185 = vadd.f32 %v1116, %v1184
      %v1186 = vpop.f32.mrb[0].mxu0
      %v1187 = vpop.f32.mrb[0].mxu0
      %v1188 = vadd.f32 %v1116, %v1187
      %v1189 = vpop.f32.mrb[0].mxu0
      %1190 = vmatprep.mubr.bf16.mxu0 0
      %1191 = vmatmul.mubr.bf16.gmra.mrb[0].mxu0 %v1125
      %v1192 = vpop.f32.mrb[0].mxu0
      %v1193 = vadd.f32 %v1116, %v1192
      %v1194 = vpop.f32.mrb[0].mxu0
      %v1195 = vpop.f32.mrb[0].mxu0
      %v1196 = vadd.f32 %v1116, %v1195
      %v1197 = vpop.f32.mrb[0].mxu0
      %1198 = vmatprep.mubr.bf16.mxu0 0
      %1199 = vmatmul.mubr.bf16.gmra.mrb[0].mxu0 %v1128
      %v1200 = vpop.f32.mrb[0].mxu0
      %v1201 = vadd.f32 %v1116, %v1200
      %v1202 = vpop.f32.mrb[0].mxu0
      %v1203 = vpop.f32.mrb[0].mxu0
      %v1204 = vadd.f32 %v1116, %v1203
      %v1205 = vpop.f32.mrb[0].mxu0
      %1206 = vmatprep.mubr.bf16.mxu0 0
      %1207 = vmatmul.mubr.bf16.gmra.mrb[0].mxu0 %v1131
      %v1208 = vpop.f32.mrb[0].mxu0
      %v1209 = vadd.f32 %v1116, %v1208
      %v1210 = vpop.f32.mrb[0].mxu0
      %v1211 = vpop.f32.mrb[0].mxu0
      %v1212 = vadd.f32 %v1116, %v1211
      %v1213 = vpop.f32.mrb[0].mxu0
      %1214 = vmatprep.mubr.bf16.mxu0 0
      %1215 = vmatmul.mubr.bf16.gmra.mrb[0].mxu0 %v1134
      %v1216 = vpop.f32.mrb[0].mxu0
      %v1217 = vadd.f32 %v1116, %v1216
      %v1218 = vpop.f32.mrb[0].mxu0
      %v1219 = vpop.f32.mrb[0].mxu0
      %v1220 = vadd.f32 %v1116, %v1219
      %v1221 = vpop.f32.mrb[0].mxu0
      %1222 = vmatprep.mubr.bf16.mxu0 0
      %1223 = vmatmul.mubr.bf16.gmra.mrb[0].mxu0 %v1137
      %v1224 = vpop.f32.mrb[0].mxu0
      %v1225 = vadd.f32 %v1116, %v1224
      %v1226 = vpop.f32.mrb[0].mxu0
      %v1227 = vpop.f32.mrb[0].mxu0
      %v1228 = vadd.f32 %v1116, %v1227
      %v1229 = vpop.f32.mrb[0].mxu0
      %1230 = vmatprep.mubr.bf16.mxu0 0
      %1231 = vmatmul.mubr.bf16.gmra.mrb[0].mxu0 %v1140
      %v1232 = vpop.f32.mrb[0].mxu0
      %v1233 = vadd.f32 %v1116, %v1232
      %v1234 = vpop.f32.mrb[0].mxu0
      %v1235 = vpop.f32.mrb[0].mxu0
      %v1236 = vadd.f32 %v1116, %v1235
      %v1237 = vpop.f32.mrb[0].mxu0
      %1238 = vdwg.mxu0
      %v1239 = vmax.f32 %v1177, 0.0
      %v1240 = vmax.f32 %v1180, 0.0
      %v1241 = vmax.f32 %v1185, 0.0
      %v1242 = vmax.f32 %v1188, 0.0
      %v1243 = vmax.f32 %v1193, 0.0
      %v1244 = vmax.f32 %v1196, 0.0
      %v1245 = vmax.f32 %v1201, 0.0
      %v1246 = vmax.f32 %v1204, 0.0
      %v1247 = vmax.f32 %v1209, 0.0
      %v1248 = vmax.f32 %v1212, 0.0
      %v1249 = vmax.f32 %v1217, 0.0
      %v1250 = vmax.f32 %v1220, 0.0
      %v1251 = vmax.f32 %v1225, 0.0
      %v1252 = vmax.f32 %v1228, 0.0
      %v1253 = vmax.f32 %v1233, 0.0
      %v1254 = vmax.f32 %v1236, 0.0
      %v1255 = vpack.c.bf16 %v689, %v688
      %v1256 = vpack.c.bf16 %v691, %v690
      %v1257 = vpack.c.bf16 %v693, %v692
      %v1258 = vpack.c.bf16 %v695, %v694
      %v1259 = vpack.c.bf16 %v697, %v696
      %v1260 = vpack.c.bf16 %v699, %v698
      %v1261 = vpack.c.bf16 %v701, %v700
      %v1262 = vpack.c.bf16 %v703, %v702
      %v1263 = vld [vmem:[%s10] sm:$0xf]
      %v1264 = vld [vmem:[%s10 + $0x4] sm:$0xf]
      %v1265 = vld [vmem:[%s10 + $0x8] sm:$0xf]
      %v1266 = vld [vmem:[%s10 + $0xc] sm:$0xf]
      %v1267 = vpack.c.bf16 %v1240, %v1239
      %v1268 = vpack.c.bf16 %v1242, %v1241
      %v1269 = vpack.c.bf16 %v1244, %v1243
      %v1270 = vpack.c.bf16 %v1246, %v1245
      %v1271 = vpack.c.bf16 %v1248, %v1247
      %v1272 = vpack.c.bf16 %v1250, %v1249
      %v1273 = vpack.c.bf16 %v1252, %v1251
      %v1274 = vpack.c.bf16 %v1254, %v1253
      %v1275 = vld [vmem:[%s11] sm:$0xf]
      %v1276 = vld [vmem:[%s11 + $0x4] sm:$0xf]
      %v1277 = vld [vmem:[%s11 + $0x8] sm:$0xf]
      %v1278 = vld [vmem:[%s11 + $0xc] sm:$0xf]
      %v1283 = vunpack.c.l.b16 %v1275
      %v1284 = vunpack.c.l.b16 %v1276
      %v1285 = vunpack.c.l.b16 %v1277
      %v1286 = vunpack.c.l.b16 %v1278
      %v1287 = vpack.c.b16 %v1284, %v1283
      %v1288 = vpack.c.b16 %v1286, %v1285
      %v1292 = vsel %vm980, %v1267, 0
      %v1295 = vsel %vm980, %v1268, 0
      %v1298 = vsel %vm980, %v1269, 0
      %v1301 = vsel %vm980, %v1270, 0
      %v1304 = vsel %vm980, %v1271, 0
      %v1307 = vsel %vm980, %v1272, 0
      %v1310 = vsel %vm980, %v1273, 0
      %v1313 = vsel %vm980, %v1274, 0
      %1315 = vmatprep.subr.bf16.mxu0 0
      %1316 = vmatpush1.bf16.msra.mxu0 %v1287
      %1317 = vmatprep.subr.bf16.mxu0 0
      %1318 = vmatpush1.bf16.msra.mxu0 %v1288
      %1319 = vmatprep.subr.bf16.mxu0 0
      %1320 = vmatpush1.bf16.msra.mxu0 0
      %1321 = vmatprep.subr.bf16.mxu0 0
      %1322 = vmatpush1.bf16.msra.mxu0 0
      %1323 = vmatprep.subr.bf16.mxu0 0
      %1324 = vmatpush1.bf16.msra.mxu0 0
      %1325 = vmatprep.subr.bf16.mxu0 0
      %1326 = vmatpush1.bf16.msra.mxu0 0
      %1327 = vmatprep.subr.bf16.mxu0 0
      %1328 = vmatpush1.bf16.msra.mxu0 0
      %1329 = vmatprep.subr.bf16.mxu0 0
      %1330 = vmatpush1.bf16.msra.mxu0 0
      %1331 = vmatprep.subr.bf16.mxu0 0
      %1332 = vmatpush1.bf16.msra.mxu0 0
      %1333 = vmatprep.subr.bf16.mxu0 0
      %1334 = vmatpush1.bf16.msra.mxu0 0
      %1335 = vmatprep.subr.bf16.mxu0 0
      %1336 = vmatpush1.bf16.msra.mxu0 0
      %1337 = vmatprep.subr.bf16.mxu0 0
      %1338 = vmatpush1.bf16.msra.mxu0 0
      %1339 = vmatprep.subr.bf16.mxu0 0
      %1340 = vmatpush1.bf16.msra.mxu0 0
      %1341 = vmatprep.subr.bf16.mxu0 0
      %1342 = vmatpush1.bf16.msra.mxu0 0
      %1343 = vmatprep.subr.bf16.mxu0 0
      %1344 = vmatpush1.bf16.msra.mxu0 0
      %1345 = vmatprep.subr.bf16.mxu0 0
      %1346 = vmatpush1.bf16.msra.mxu0 0
      %1347 = vmatprep.mubr.bf16.mxu0 0
      %1348 = vmatmul.mubr.bf16.gmra.mrb[0].mxu0 %v1292
      %v1349 = vpop.f32.mrb[0].mxu0
      %v1350 = vadd.f32 0.0, %v1349
      %v1351 = vpop.f32.mrb[0].mxu0
      %v1352 = vpop.f32.mrb[0].mxu0
      %v1353 = vadd.f32 0.0, %v1352
      %v1354 = vpop.f32.mrb[0].mxu0
      %1355 = vmatprep.mubr.bf16.mxu0 0
      %1356 = vmatmul.mubr.bf16.gmra.mrb[0].mxu0 %v1295
      %v1357 = vpop.f32.mrb[0].mxu0
      %v1358 = vadd.f32 0.0, %v1357
      %v1359 = vpop.f32.mrb[0].mxu0
      %v1360 = vpop.f32.mrb[0].mxu0
      %v1361 = vadd.f32 0.0, %v1360
      %v1362 = vpop.f32.mrb[0].mxu0
      %1363 = vmatprep.mubr.bf16.mxu0 0
      %1364 = vmatmul.mubr.bf16.gmra.mrb[0].mxu0 %v1298
      %v1365 = vpop.f32.mrb[0].mxu0
      %v1366 = vadd.f32 0.0, %v1365
      %v1367 = vpop.f32.mrb[0].mxu0
      %v1368 = vpop.f32.mrb[0].mxu0
      %v1369 = vadd.f32 0.0, %v1368
      %v1370 = vpop.f32.mrb[0].mxu0
      %1371 = vmatprep.mubr.bf16.mxu0 0
      %1372 = vmatmul.mubr.bf16.gmra.mrb[0].mxu0 %v1301
      %v1373 = vpop.f32.mrb[0].mxu0
      %v1374 = vadd.f32 0.0, %v1373
      %v1375 = vpop.f32.mrb[0].mxu0
      %v1376 = vpop.f32.mrb[0].mxu0
      %v1377 = vadd.f32 0.0, %v1376
      %v1378 = vpop.f32.mrb[0].mxu0
      %1379 = vmatprep.mubr.bf16.mxu0 0
      %1380 = vmatmul.mubr.bf16.gmra.mrb[0].mxu0 %v1304
      %v1381 = vpop.f32.mrb[0].mxu0
      %v1382 = vadd.f32 0.0, %v1381
      %v1383 = vpop.f32.mrb[0].mxu0
      %v1384 = vpop.f32.mrb[0].mxu0
      %v1385 = vadd.f32 0.0, %v1384
      %v1386 = vpop.f32.mrb[0].mxu0
      %1387 = vmatprep.mubr.bf16.mxu0 0
      %1388 = vmatmul.mubr.bf16.gmra.mrb[0].mxu0 %v1307
      %v1389 = vpop.f32.mrb[0].mxu0
      %v1390 = vadd.f32 0.0, %v1389
      %v1391 = vpop.f32.mrb[0].mxu0
      %v1392 = vpop.f32.mrb[0].mxu0
      %v1393 = vadd.f32 0.0, %v1392
      %v1394 = vpop.f32.mrb[0].mxu0
      %1395 = vmatprep.mubr.bf16.mxu0 0
      %1396 = vmatmul.mubr.bf16.gmra.mrb[0].mxu0 %v1310
      %v1397 = vpop.f32.mrb[0].mxu0
      %v1398 = vadd.f32 0.0, %v1397
      %v1399 = vpop.f32.mrb[0].mxu0
      %v1400 = vpop.f32.mrb[0].mxu0
      %v1401 = vadd.f32 0.0, %v1400
      %v1402 = vpop.f32.mrb[0].mxu0
      %1403 = vmatprep.mubr.bf16.mxu0 0
      %1404 = vmatmul.mubr.bf16.gmra.mrb[0].mxu0 %v1313
      %v1405 = vpop.f32.mrb[0].mxu0
      %v1406 = vadd.f32 0.0, %v1405
      %v1407 = vpop.f32.mrb[0].mxu0
      %v1408 = vpop.f32.mrb[0].mxu0
      %v1409 = vadd.f32 0.0, %v1408
      %v1410 = vpop.f32.mrb[0].mxu0
      %1411 = vdwg.mxu0
      %v1416 = vunpack.c.l.b16 %v1263
      %v1417 = vunpack.c.l.b16 %v1264
      %v1418 = vunpack.c.l.b16 %v1265
      %v1419 = vunpack.c.l.b16 %v1266
      %v1420 = vpack.c.b16 %v1417, %v1416
      %v1421 = vpack.c.b16 %v1419, %v1418
      %v1425 = vsel %vm980, %v1255, 0
      %v1428 = vsel %vm980, %v1256, 0
      %v1431 = vsel %vm980, %v1257, 0
      %v1434 = vsel %vm980, %v1258, 0
      %v1437 = vsel %vm980, %v1259, 0
      %v1440 = vsel %vm980, %v1260, 0
      %v1443 = vsel %vm980, %v1261, 0
      %v1446 = vsel %vm980, %v1262, 0
      %1448 = vmatprep.subr.bf16.mxu0 0
      %1449 = vmatpush1.bf16.msra.mxu0 %v1420
      %1450 = vmatprep.subr.bf16.mxu0 0
      %1451 = vmatpush1.bf16.msra.mxu0 %v1421
      %1452 = vmatprep.subr.bf16.mxu0 0
      %1453 = vmatpush1.bf16.msra.mxu0 0
      %1454 = vmatprep.subr.bf16.mxu0 0
      %1455 = vmatpush1.bf16.msra.mxu0 0
      %1456 = vmatprep.subr.bf16.mxu0 0
      %1457 = vmatpush1.bf16.msra.mxu0 0
      %1458 = vmatprep.subr.bf16.mxu0 0
      %1459 = vmatpush1.bf16.msra.mxu0 0
      %1460 = vmatprep.subr.bf16.mxu0 0
      %1461 = vmatpush1.bf16.msra.mxu0 0
      %1462 = vmatprep.subr.bf16.mxu0 0
      %1463 = vmatpush1.bf16.msra.mxu0 0
      %1464 = vmatprep.subr.bf16.mxu0 0
      %1465 = vmatpush1.bf16.msra.mxu0 0
      %1466 = vmatprep.subr.bf16.mxu0 0
      %1467 = vmatpush1.bf16.msra.mxu0 0
      %1468 = vmatprep.subr.bf16.mxu0 0
      %1469 = vmatpush1.bf16.msra.mxu0 0
      %1470 = vmatprep.subr.bf16.mxu0 0
      %1471 = vmatpush1.bf16.msra.mxu0 0
      %1472 = vmatprep.subr.bf16.mxu0 0
      %1473 = vmatpush1.bf16.msra.mxu0 0
      %1474 = vmatprep.subr.bf16.mxu0 0
      %1475 = vmatpush1.bf16.msra.mxu0 0
      %1476 = vmatprep.subr.bf16.mxu0 0
      %1477 = vmatpush1.bf16.msra.mxu0 0
      %1478 = vmatprep.subr.bf16.mxu0 0
      %1479 = vmatpush1.bf16.msra.mxu0 0
      %1480 = vmatprep.mubr.bf16.mxu0 0
      %1481 = vmatmul.mubr.bf16.gmra.mrb[0].mxu0 %v1425
      %v1482 = vpop.f32.mrb[0].mxu0
      %v1483 = vadd.f32 %v1350, %v1482
      %v1484 = vpop.f32.mrb[0].mxu0
      %v1485 = vpop.f32.mrb[0].mxu0
      %v1486 = vadd.f32 %v1353, %v1485
      %v1487 = vpop.f32.mrb[0].mxu0
      %1488 = vmatprep.mubr.bf16.mxu0 0
      %1489 = vmatmul.mubr.bf16.gmra.mrb[0].mxu0 %v1428
      %v1490 = vpop.f32.mrb[0].mxu0
      %v1491 = vadd.f32 %v1358, %v1490
      %v1492 = vpop.f32.mrb[0].mxu0
      %v1493 = vpop.f32.mrb[0].mxu0
      %v1494 = vadd.f32 %v1361, %v1493
      %v1495 = vpop.f32.mrb[0].mxu0
      %1496 = vmatprep.mubr.bf16.mxu0 0
      %1497 = vmatmul.mubr.bf16.gmra.mrb[0].mxu0 %v1431
      %v1498 = vpop.f32.mrb[0].mxu0
      %v1499 = vadd.f32 %v1366, %v1498
      %v1500 = vpop.f32.mrb[0].mxu0
      %v1501 = vpop.f32.mrb[0].mxu0
      %v1502 = vadd.f32 %v1369, %v1501
      %v1503 = vpop.f32.mrb[0].mxu0
      %1504 = vmatprep.mubr.bf16.mxu0 0
      %1505 = vmatmul.mubr.bf16.gmra.mrb[0].mxu0 %v1434
      %v1506 = vpop.f32.mrb[0].mxu0
      %v1507 = vadd.f32 %v1374, %v1506
      %v1508 = vpop.f32.mrb[0].mxu0
      %v1509 = vpop.f32.mrb[0].mxu0
      %v1510 = vadd.f32 %v1377, %v1509
      %v1511 = vpop.f32.mrb[0].mxu0
      %1512 = vmatprep.mubr.bf16.mxu0 0
      %1513 = vmatmul.mubr.bf16.gmra.mrb[0].mxu0 %v1437
      %v1514 = vpop.f32.mrb[0].mxu0
      %v1515 = vadd.f32 %v1382, %v1514
      %v1516 = vpop.f32.mrb[0].mxu0
      %v1517 = vpop.f32.mrb[0].mxu0
      %v1518 = vadd.f32 %v1385, %v1517
      %v1519 = vpop.f32.mrb[0].mxu0
      %1520 = vmatprep.mubr.bf16.mxu0 0
      %1521 = vmatmul.mubr.bf16.gmra.mrb[0].mxu0 %v1440
      %v1522 = vpop.f32.mrb[0].mxu0
      %v1523 = vadd.f32 %v1390, %v1522
      %v1524 = vpop.f32.mrb[0].mxu0
      %v1525 = vpop.f32.mrb[0].mxu0
      %v1526 = vadd.f32 %v1393, %v1525
      %v1527 = vpop.f32.mrb[0].mxu0
      %1528 = vmatprep.mubr.bf16.mxu0 0
      %1529 = vmatmul.mubr.bf16.gmra.mrb[0].mxu0 %v1443
      %v1530 = vpop.f32.mrb[0].mxu0
      %v1531 = vadd.f32 %v1398, %v1530
      %v1532 = vpop.f32.mrb[0].mxu0
      %v1533 = vpop.f32.mrb[0].mxu0
      %v1534 = vadd.f32 %v1401, %v1533
      %v1535 = vpop.f32.mrb[0].mxu0
      %1536 = vmatprep.mubr.bf16.mxu0 0
      %1537 = vmatmul.mubr.bf16.gmra.mrb[0].mxu0 %v1446
      %v1538 = vpop.f32.mrb[0].mxu0
      %v1539 = vadd.f32 %v1406, %v1538
      %v1540 = vpop.f32.mrb[0].mxu0
      %v1541 = vpop.f32.mrb[0].mxu0
      %v1542 = vadd.f32 %v1409, %v1541
      %v1543 = vpop.f32.mrb[0].mxu0
      %1544 = vdwg.mxu0
      %v1545 = vld [vmem:[%s12] sm:$0x1]
      %v1547 = vlaneseq
      %v1548 = vshrl.u32 %v1547, 7
      %v1549 = vsub.s32 0, %v1548
      %v1550 = vrot.slane %v1545, %v1549
      %v1552 = vadd.f32 %v1483, %v1550
      %v1553 = vadd.f32 %v1486, %v1550
      %v1554 = vadd.f32 %v1491, %v1550
      %v1555 = vadd.f32 %v1494, %v1550
      %v1556 = vadd.f32 %v1499, %v1550
      %v1557 = vadd.f32 %v1502, %v1550
      %v1558 = vadd.f32 %v1507, %v1550
      %v1559 = vadd.f32 %v1510, %v1550
      %v1560 = vadd.f32 %v1515, %v1550
      %v1561 = vadd.f32 %v1518, %v1550
      %v1562 = vadd.f32 %v1523, %v1550
      %v1563 = vadd.f32 %v1526, %v1550
      %v1564 = vadd.f32 %v1531, %v1550
      %v1565 = vadd.f32 %v1534, %v1550
      %v1566 = vadd.f32 %v1539, %v1550
      %v1567 = vadd.f32 %v1542, %v1550
      %1568 = vst [vmem:[%s492] sm:$0xff] %v1552
      %1569 = vst [vmem:[%s492 + $0x8] sm:$0xff] %v1553
      %1570 = vst [vmem:[%s492 + $0x10] sm:$0xff] %v1554
      %1571 = vst [vmem:[%s492 + $0x18] sm:$0xff] %v1555
      %1572 = vst [vmem:[%s492 + $0x20] sm:$0xff] %v1556
      %1573 = vst [vmem:[%s492 + $0x28] sm:$0xff] %v1557
      %1574 = vst [vmem:[%s492 + $0x30] sm:$0xff] %v1558
      %1575 = vst [vmem:[%s492 + $0x38] sm:$0xff] %v1559
      %1576 = vst [vmem:[%s492 + $0x40] sm:$0xff] %v1560
      %1577 = vst [vmem:[%s492 + $0x48] sm:$0xff] %v1561
      %1578 = vst [vmem:[%s492 + $0x50] sm:$0xff] %v1562
      %1579 = vst [vmem:[%s492 + $0x58] sm:$0xff] %v1563
      %1580 = vst [vmem:[%s492 + $0x60] sm:$0xff] %v1564
      %1581 = vst [vmem:[%s492 + $0x68] sm:$0xff] %v1565
      %1582 = vst [vmem:[%s492 + $0x70] sm:$0xff] %v1566
      %1583 = vst [vmem:[%s492 + $0x78] sm:$0xff] %v1567
      %s1584 = smul.u32 16, %s24
      %p1585 = scmp.lt.s32.totalorder %s1584, 31
      %s1586 = scalar_select %p1585, %s1584, 31
      %s1587 = smul.addr %s1586, 8
      %s1588 = scalar_lea.vmem %s13, %s1587
      // Predicated region
      $region73: #{hiernet_forward.1} parent=71 // pred_check
        %p1589 = pneg %p335
      $region74: #{hiernet_forward.1} parent=71 // pred_check_branch
        %1591 = sbr.rel (%p1589) target = $region76
      $region75: #{hiernet_forward.1} parent=71 // pred_region
        %s1592 = smul.u32 16, %s24
      $region76: #{hiernet_forward.1} parent=71 // pred_fallthru
        _
    $region72: #{hiernet_forward.1} parent=5 // pred_fallthru
      _
    %p1593 = scmp.le.s32.totalorder 2, %s19
    // Predicated region
    $region77: #{hiernet_forward.1} parent=5 // pred_check
      %p1594 = pneg %p1593
    $region78: #{hiernet_forward.1} parent=5 // pred_check_branch
      %1596 = sbr.rel (%p1594) target = $region80
    $region79: #{hiernet_forward.1} parent=5 // pred_region
      %s1597 = ssub.s32 %s19, 2
      // Predicated region
      $region81: #{hiernet_forward.1} parent=79 // pred_check
        %p1598 = pneg %p341
      $region82: #{hiernet_forward.1} parent=79 // pred_check_branch
        %1600 = sbr.rel (%p1598) target = $region84
      $region83: #{hiernet_forward.1} parent=79 // pred_region
        %s1601 = smul.u32 16, %s25
        %p1602 = scmp.lt.s32.totalorder %s1601, 31
        %s1603 = scalar_select %p1602, %s1601, 31
        %s1604 = smul.addr %s1603, 8
        %s1605 = scalar_lea.vmem %s13, %s1604
      $region84: #{hiernet_forward.1} parent=79 // pred_fallthru
        _
    $region80: #{hiernet_forward.1} parent=5 // pred_fallthru
      _
  $region6: #{hiernet_forward.1} parent=0 // loop_footer
    %s23 = sadd.s32 1, %s19
  $region7: #{hiernet_forward.1} parent=0 // loop_footer_branch
    %18 = sbr.rel target = $region3
  $region8: #{hiernet_forward.1} parent=0 // loop_exit
    _

</llo_original>
